<compile_context>
chip_gen: v7x
topology: tpu7x:2x2x1
jax: 0.10.0
libtpu: 0.0.40
codegen_flags: <defaults>
</compile_context>

<pallas_src>
import jax
import jax.numpy as jnp
from jax.experimental import pallas as pl
from jax.experimental.pallas import tpu as pltpu


def _shuffle_block_kernel(x_ref, w_ref, b_ref, a_ref, o_ref):
    """Grid = (batch, row_tile).

    x_ref : (1, 3, H+2, W, Cin)   bf16 kx-pre-shifted padded image (resident across row tiles)
    w_ref : (9*Cin, Cout)         bf16 im2col weights, columns permuted to (i*r+j)*C + c
    b_ref : (1, Cout)             f32 conv bias, same column permutation
    a_ref : (1, 1)                f32 PReLU slope (SMEM scalar)
    o_ref : (1, TH, r, W, r*C)    pixel-shuffle-ordered conv+bias+PReLU rows for this tile
    """
    th, r, W, rC = o_ref.shape[1], o_ref.shape[2], o_ref.shape[3], o_ref.shape[4]
    Cin = x_ref.shape[4]
    row0 = pl.program_id(1) * th

    # im2col: nine aligned (th, W, Cin) taps (kx shift was pre-applied in the wrapper, ky
    # shift is a page-dim pl.ds).  Tap order (ky, kx, cin) matches the weight row order.
    taps = [x_ref[0, kx, pl.ds(row0 + ky, th), :, :]
            for ky in range(3) for kx in range(3)]
    patch = jnp.concatenate(taps, axis=-1).reshape(th * W, 9 * Cin)

    # Single MXU matmul: bf16 operands, f32 accumulation (K = 9*Cin = 576).
    acc = jnp.dot(patch, w_ref[...], preferred_element_type=jnp.float32)

    # Epilogue in f32: bias + PReLU (single shared slope).
    acc = acc + b_ref[0]
    alpha = a_ref[0, 0]
    acc = jnp.where(acc > 0, acc, alpha * acc).astype(o_ref.dtype)

    # Lane-dense stores: columns are already (i, j, c)-ordered, so slice i gives the
    # 128-lane (j, c) block for output sub-row i.  Pure 128-aligned lane slices, no XLU.
    for i in range(r):
        o_ref[0, :, i, :, :] = acc[:, i * rC:(i + 1) * rC].reshape(th, W, rC)


def _pick_tile_h(H, W, Cout, out_bytes=4):
    """Divisor of H targeting M = tile_h*W >= 256 (ideally 512) to fill the 256-row MXU on
    v6e/v7x, while keeping the output tile <= ~1 MiB.  (v5e's 128-wide MXU is full at
    M=128 already, but fewer grid steps still amortize the ~0.35 us/step overhead.)"""
    cap = max(1, (1 << 20) // max(1, W * Cout * out_bytes))
    target = -(-512 // W)                                   # ceil(512 / W)
    divisors = [d for d in range(1, H + 1) if H % d == 0]
    cands = [d for d in divisors if d <= cap] or [min(divisors)]
    ge = [d for d in cands if d >= target]
    return min(ge) if ge else max(cands)


def _vmem_bytes_estimate(H, W, Cin, Cout, tile_h, r, out_bytes):
    """Rough VMEM residency (double-buffered pipeline blocks + in-kernel temporaries)."""
    rup = lambda a, m: -(-a // m) * m
    x_blk = 3 * (H + 2) * rup(W, 8) * rup(Cin, 128) * 2                     # bf16 image copies
    w_blk = rup(9 * Cin, 8) * rup(Cout, 128) * 2                            # bf16 weights
    b_blk = 8 * rup(Cout, 128) * 4                                          # f32 bias
    o_blk = tile_h * r * rup(W, 8) * rup(r * (Cout // (r * r)), 128) * out_bytes
    tmp = rup(tile_h * W, 8) * (rup(9 * Cin, 128) * 2 + rup(Cout, 128) * 4)  # patch + acc
    return 2 * (x_blk + w_blk + b_blk + o_blk) + tmp


def shuffle_block_forward(x_nchw, weight_oihw, bias, prelu_alpha, upscale=2, tile_h=None):
    """Equivalent of ShuffleBlock.forward.  x: (N, Cin, H, W) -> (N, Cout/r^2, H*r, W*r)."""
    N, Cin, H, W = x_nchw.shape
    Cout = weight_oihw.shape[0]
    r = upscale
    assert Cout % (r * r) == 0
    C = Cout // (r * r)
    rC = r * C

    compute_dtype = jnp.bfloat16
    # TODO(synk): writing bf16 here halves kernel writeback if downstream precision allows.
    out_dtype = x_nchw.dtype
    out_bytes = jnp.dtype(out_dtype).itemsize

    if tile_h is None:
        tile_h = _pick_tile_h(H, W, Cout, out_bytes)
        # v7x has 2 TensorCores: keep >= 2 "parallel" grid steps so both stay busy.
        if N == 1 and H // tile_h < 2 and H % 2 == 0:
            tile_h = H // 2
    assert H % tile_h == 0, (H, tile_h)

    # --- glue: NCHW -> padded NHWC bf16, then 3 kx-pre-shifted copies so every in-kernel
    #     im2col tap is a plain aligned slice (no sublane rotates). ---
    x_nhwc = jnp.transpose(x_nchw, (0, 2, 3, 1)).astype(compute_dtype)      # (N, H, W, Cin)
    x_pad = jnp.pad(x_nhwc, ((0, 0), (1, 1), (1, 1), (0, 0)))               # (N, H+2, W+2, Cin)
    x_shift = jnp.stack([x_pad[:, :, kx:kx + W, :] for kx in range(3)], axis=1)
    # x_shift: (N, 3, H+2, W, Cin)

    # Conv weights -> im2col matrix; rows ordered (ky, kx, cin).  Columns are then permuted
    # so new column (i*r + j)*C + c holds original output channel c*r^2 + i*r + j, making
    # the kernel output directly pixel-shuffle ordered.  Bias gets the same permutation.
    w_mat = jnp.transpose(weight_oihw, (2, 3, 1, 0)).reshape(9 * Cin, Cout)
    w_mat = w_mat.reshape(9 * Cin, C, r * r).transpose(0, 2, 1).reshape(9 * Cin, Cout)
    w_mat = w_mat.astype(compute_dtype)
    b2d = bias.astype(jnp.float32).reshape(C, r * r).transpose(1, 0).reshape(1, Cout)
    a2d = jnp.asarray(prelu_alpha, jnp.float32).reshape(1, 1)

    # VMEM budget: only raise the scoped limit if the resident image + tiles need it.
    # TODO(synk): for very large H*W (esp. v7x 64 MiB VMEM), switch the image input to
    #             memory_space=pl.ANY + manual per-tile halo DMA (or pltpu.emit_pipeline),
    #             and single-buffer the constant-index weight/bias blocks.
    est = _vmem_bytes_estimate(H, W, Cin, Cout, tile_h, r, out_bytes)
    vmem_limit = int(min(1.5 * est, 100 * 1024 * 1024)) if est > (32 << 20) else None

    grid = (N, H // tile_h)
    conv_out = pl.pallas_call(
        _shuffle_block_kernel,
        out_shape=jax.ShapeDtypeStruct((N, H, r, W, rC), out_dtype),
        grid_spec=pltpu.PrefetchScalarGridSpec(
            num_scalar_prefetch=0,
            grid=grid,
            in_specs=[
                # Whole pre-shifted image per batch element; block index is constant along
                # the row-tile axis so it stays VMEM-resident (no re-DMA across tiles).
                pl.BlockSpec((1, 3, H + 2, W, Cin), lambda b, t: (b, 0, 0, 0, 0)),
                pl.BlockSpec((9 * Cin, Cout), lambda b, t: (0, 0)),
                pl.BlockSpec((1, Cout), lambda b, t: (0, 0)),
                pl.BlockSpec(memory_space=pltpu.SMEM),
            ],
            out_specs=pl.BlockSpec((1, tile_h, r, W, rC), lambda b, t: (b, t, 0, 0, 0)),
        ),
        compiler_params=pltpu.CompilerParams(
            dimension_semantics=("parallel", "parallel"),
            vmem_limit_bytes=vmem_limit),
    )(x_shift, w_mat, b2d, a2d)

    # PixelShuffle is now a pure reshape of the kernel output (column permutation did the
    # work); only the NHWC -> NCHW module-interface transpose remains.
    y = conv_out.reshape(N, H * r, W * r, C)
    return jnp.transpose(y, (0, 3, 1, 2))


def _reference_forward(x_nchw, weight_oihw, bias, prelu_alpha, upscale=2,
                       compute_dtype=jnp.bfloat16):
    """Pure-JAX reference (lax.conv) using the same bf16-operand / f32-accum numerics."""
    conv = jax.lax.conv_general_dilated(
        x_nchw.astype(compute_dtype), weight_oihw.astype(compute_dtype),
        window_strides=(1, 1), padding=((1, 1), (1, 1)),
        dimension_numbers=("NCHW", "OIHW", "NCHW"),
        preferred_element_type=jnp.float32)
    conv = conv + bias.astype(jnp.float32).reshape(1, -1, 1, 1)
    N, Cout, H, W = conv.shape
    r = upscale
    C = Cout // (r * r)
    y = conv.reshape(N, C, r, r, H, W)
    y = jnp.transpose(y, (0, 1, 4, 2, 5, 3)).reshape(N, C, H * r, W * r)
    return jnp.where(y > 0, y, prelu_alpha * y).astype(x_nchw.dtype)


if __name__ == "__main__":
    # Module defaults: in_planes=64, out_planes=256, PixelShuffle(2), PReLU(0.25).
    in_planes, out_planes, r = 64, 256, 2
    N, H, W = 2, 16, 16

    key = jax.random.PRNGKey(0)
    k_x, k_w, k_b = jax.random.split(key, 3)
    x = jax.random.normal(k_x, (N, in_planes, H, W), dtype=jnp.float32)
    weight = jax.random.normal(k_w, (out_planes, in_planes, 3, 3), dtype=jnp.float32) * 0.05
    bias = jax.random.normal(k_b, (out_planes,), dtype=jnp.float32) * 0.05
    prelu_alpha = jnp.float32(0.25)   # nn.PReLU() default single shared parameter

    ref = _reference_forward(x, weight, bias, prelu_alpha, upscale=r)

    # Auto-picked tile: tile_h=H -> M = 256 rows per matmul, grid (N, 1); the batch axis
    # provides the 2 parallel steps that feed both v7x TensorCores.
    out = shuffle_block_forward(x, weight, bias, prelu_alpha, upscale=r)
    out = jax.block_until_ready(out)
    assert out.shape == (N, out_planes // (r * r), H * r, W * r)
    assert jnp.allclose(out, ref, atol=1e-2, rtol=1e-2), \
        float(jnp.max(jnp.abs(out - ref)))

    # Also exercise the multi-row-tile path (resident image sliced with pl.ds per tile).
    out2 = jax.block_until_ready(
        shuffle_block_forward(x, weight, bias, prelu_alpha, upscale=r, tile_h=8))
    assert jnp.allclose(out2, ref, atol=1e-2, rtol=1e-2), \
        float(jnp.max(jnp.abs(out2 - ref)))

    print("KERNEL_OK")
</pallas_src>

<mosaic_0001>
module attributes {stable_mosaic.version = 11 : i64} {
  func.func @_shuffle_block_kernel(%arg0: i32, %arg1: i32, %arg2: memref<1x3x18x16x64xbf16, #tpu.memory_space<vmem>>, %arg3: memref<576x256xbf16, #tpu.memory_space<vmem>>, %arg4: memref<1x256xf32, #tpu.memory_space<vmem>>, %arg5: memref<1x1xf32, #tpu.memory_space<smem>>, %arg6: memref<1x16x2x16x128xf32, #tpu.memory_space<vmem>>) attributes {dimension_semantics = [#tpu.dimension_semantics<parallel>, #tpu.dimension_semantics<parallel>], iteration_bounds = array<i64: 2, 1>, scalar_prefetch = 0 : i64, scratch_operands = 0 : i64, tpu.core_type = #tpu.core_type<tc>, window_params = [{transform_indices = @transform_0, window_bounds = array<i64: 1, 3, 18, 16, 64>}, {pipeline_mode = #tpu.pipeline_mode<synchronous>, transform_indices = @transform_1, window_bounds = array<i64: 576, 256>}, {pipeline_mode = #tpu.pipeline_mode<synchronous>, transform_indices = @transform_2, window_bounds = array<i64: 1, 256>}, {transform_indices = @transform_3, window_bounds = array<i64: 1, 1>}, {transform_indices = @transform_4, window_bounds = array<i64: 1, 16, 2, 16, 128>}]} {
    %c16_i32 = arith.constant 16 : i32
    %0 = arith.muli %arg1, %c16_i32 : i32
    %c0_i32 = arith.constant 0 : i32
    %1 = arith.addi %0, %c0_i32 : i32
    %c0 = arith.constant 0 : index
    %c0_0 = arith.constant 0 : index
    %2 = arith.index_cast %1 : i32 to index
    %c0_1 = arith.constant 0 : index
    %c0_2 = arith.constant 0 : index
    %3 = vector.load %arg2[%c0, %c0_0, %2, %c0_1, %c0_2] : memref<1x3x18x16x64xbf16, #tpu.memory_space<vmem>>, vector<1x1x16x16x64xbf16>
    %4 = vector.shape_cast %3 : vector<1x1x16x16x64xbf16> to vector<16x16x64xbf16>
    %c0_i32_3 = arith.constant 0 : i32
    %5 = arith.addi %0, %c0_i32_3 : i32
    %c0_4 = arith.constant 0 : index
    %c1 = arith.constant 1 : index
    %6 = arith.index_cast %5 : i32 to index
    %c0_5 = arith.constant 0 : index
    %c0_6 = arith.constant 0 : index
    %7 = vector.load %arg2[%c0_4, %c1, %6, %c0_5, %c0_6] : memref<1x3x18x16x64xbf16, #tpu.memory_space<vmem>>, vector<1x1x16x16x64xbf16>
    %8 = vector.shape_cast %7 : vector<1x1x16x16x64xbf16> to vector<16x16x64xbf16>
    %c0_i32_7 = arith.constant 0 : i32
    %9 = arith.addi %0, %c0_i32_7 : i32
    %c0_8 = arith.constant 0 : index
    %c2 = arith.constant 2 : index
    %10 = arith.index_cast %9 : i32 to index
    %c0_9 = arith.constant 0 : index
    %c0_10 = arith.constant 0 : index
    %11 = vector.load %arg2[%c0_8, %c2, %10, %c0_9, %c0_10] : memref<1x3x18x16x64xbf16, #tpu.memory_space<vmem>>, vector<1x1x16x16x64xbf16>
    %12 = vector.shape_cast %11 : vector<1x1x16x16x64xbf16> to vector<16x16x64xbf16>
    %c1_i32 = arith.constant 1 : i32
    %13 = arith.addi %0, %c1_i32 : i32
    %c0_11 = arith.constant 0 : index
    %c0_12 = arith.constant 0 : index
    %14 = arith.index_cast %13 : i32 to index
    %c0_13 = arith.constant 0 : index
    %c0_14 = arith.constant 0 : index
    %15 = vector.load %arg2[%c0_11, %c0_12, %14, %c0_13, %c0_14] : memref<1x3x18x16x64xbf16, #tpu.memory_space<vmem>>, vector<1x1x16x16x64xbf16>
    %16 = vector.shape_cast %15 : vector<1x1x16x16x64xbf16> to vector<16x16x64xbf16>
    %c1_i32_15 = arith.constant 1 : i32
    %17 = arith.addi %0, %c1_i32_15 : i32
    %c0_16 = arith.constant 0 : index
    %c1_17 = arith.constant 1 : index
    %18 = arith.index_cast %17 : i32 to index
    %c0_18 = arith.constant 0 : index
    %c0_19 = arith.constant 0 : index
    %19 = vector.load %arg2[%c0_16, %c1_17, %18, %c0_18, %c0_19] : memref<1x3x18x16x64xbf16, #tpu.memory_space<vmem>>, vector<1x1x16x16x64xbf16>
    %20 = vector.shape_cast %19 : vector<1x1x16x16x64xbf16> to vector<16x16x64xbf16>
    %c1_i32_20 = arith.constant 1 : i32
    %21 = arith.addi %0, %c1_i32_20 : i32
    %c0_21 = arith.constant 0 : index
    %c2_22 = arith.constant 2 : index
    %22 = arith.index_cast %21 : i32 to index
    %c0_23 = arith.constant 0 : index
    %c0_24 = arith.constant 0 : index
    %23 = vector.load %arg2[%c0_21, %c2_22, %22, %c0_23, %c0_24] : memref<1x3x18x16x64xbf16, #tpu.memory_space<vmem>>, vector<1x1x16x16x64xbf16>
    %24 = vector.shape_cast %23 : vector<1x1x16x16x64xbf16> to vector<16x16x64xbf16>
    %c2_i32 = arith.constant 2 : i32
    %25 = arith.addi %0, %c2_i32 : i32
    %c0_25 = arith.constant 0 : index
    %c0_26 = arith.constant 0 : index
    %26 = arith.index_cast %25 : i32 to index
    %c0_27 = arith.constant 0 : index
    %c0_28 = arith.constant 0 : index
    %27 = vector.load %arg2[%c0_25, %c0_26, %26, %c0_27, %c0_28] : memref<1x3x18x16x64xbf16, #tpu.memory_space<vmem>>, vector<1x1x16x16x64xbf16>
    %28 = vector.shape_cast %27 : vector<1x1x16x16x64xbf16> to vector<16x16x64xbf16>
    %c2_i32_29 = arith.constant 2 : i32
    %29 = arith.addi %0, %c2_i32_29 : i32
    %c0_30 = arith.constant 0 : index
    %c1_31 = arith.constant 1 : index
    %30 = arith.index_cast %29 : i32 to index
    %c0_32 = arith.constant 0 : index
    %c0_33 = arith.constant 0 : index
    %31 = vector.load %arg2[%c0_30, %c1_31, %30, %c0_32, %c0_33] : memref<1x3x18x16x64xbf16, #tpu.memory_space<vmem>>, vector<1x1x16x16x64xbf16>
    %32 = vector.shape_cast %31 : vector<1x1x16x16x64xbf16> to vector<16x16x64xbf16>
    %c2_i32_34 = arith.constant 2 : i32
    %33 = arith.addi %0, %c2_i32_34 : i32
    %c0_35 = arith.constant 0 : index
    %c2_36 = arith.constant 2 : index
    %34 = arith.index_cast %33 : i32 to index
    %c0_37 = arith.constant 0 : index
    %c0_38 = arith.constant 0 : index
    %35 = vector.load %arg2[%c0_35, %c2_36, %34, %c0_37, %c0_38] : memref<1x3x18x16x64xbf16, #tpu.memory_space<vmem>>, vector<1x1x16x16x64xbf16>
    %36 = vector.shape_cast %35 : vector<1x1x16x16x64xbf16> to vector<16x16x64xbf16>
    %37 = tpu.concatenate %4, %8, %12, %16, %20, %24, %28, %32, %36 in 2 : vector<16x16x64xbf16>, vector<16x16x64xbf16>, vector<16x16x64xbf16>, vector<16x16x64xbf16>, vector<16x16x64xbf16>, vector<16x16x64xbf16>, vector<16x16x64xbf16>, vector<16x16x64xbf16>, vector<16x16x64xbf16> -> vector<16x16x576xbf16>
    %38 = vector.shape_cast %37 : vector<16x16x576xbf16> to vector<256x576xbf16>
    %c0_39 = arith.constant 0 : index
    %c0_40 = arith.constant 0 : index
    %39 = vector.load %arg3[%c0_39, %c0_40] : memref<576x256xbf16, #tpu.memory_space<vmem>>, vector<576x256xbf16>
    %cst = arith.constant dense<0.000000e+00> : vector<256x256xf32>
    %40 = tpu.matmul %38, %39, %cst {dimension_numbers = #tpu.dot_dimension_numbers<[1], [0], [0], [1], [0, 0, 1, 1], [], []>} : vector<256x576xbf16>, vector<576x256xbf16>, vector<256x256xf32> -> vector<256x256xf32>
    %c0_41 = arith.constant 0 : index
    %c0_42 = arith.constant 0 : index
    %41 = vector.load %arg4[%c0_41, %c0_42] : memref<1x256xf32, #tpu.memory_space<vmem>>, vector<1x256xf32>
    %42 = vector.shape_cast %41 : vector<1x256xf32> to vector<256xf32>
    %43 = vector.shape_cast %42 : vector<256xf32> to vector<1x256xf32>
    %44 = vector.broadcast %43 : vector<1x256xf32> to vector<256x256xf32>
    %45 = arith.addf %40, %44 : vector<256x256xf32>
    %c0_43 = arith.constant 0 : index
    %c0_44 = arith.constant 0 : index
    %46 = memref.load %arg5[%c0_43, %c0_44] : memref<1x1xf32, #tpu.memory_space<smem>>
    %cst_45 = arith.constant 0.000000e+00 : f32
    %47 = vector.broadcast %cst_45 : f32 to vector<256x256xf32>
    %48 = arith.cmpf ogt, %45, %47 : vector<256x256xf32>
    %49 = vector.broadcast %46 : f32 to vector<256x256xf32>
    %50 = arith.mulf %49, %45 : vector<256x256xf32>
    %51 = arith.select %48, %45, %50 : vector<256x256xi1>, vector<256x256xf32>
    %52 = vector.extract_strided_slice %51 {offsets = [0, 0], sizes = [256, 128], strides = [1, 1]} : vector<256x256xf32> to vector<256x128xf32>
    %53 = vector.shape_cast %52 : vector<256x128xf32> to vector<16x16x128xf32>
    %c0_46 = arith.constant 0 : index
    %c0_47 = arith.constant 0 : index
    %c0_48 = arith.constant 0 : index
    %c0_49 = arith.constant 0 : index
    %c0_50 = arith.constant 0 : index
    %54 = vector.load %arg6[%c0_46, %c0_47, %c0_48, %c0_49, %c0_50] : memref<1x16x2x16x128xf32, #tpu.memory_space<vmem>>, vector<1x16x1x16x128xf32>
    %55 = vector.shape_cast %54 : vector<1x16x1x16x128xf32> to vector<16x16x128xf32>
    %56 = vector.shape_cast %53 : vector<16x16x128xf32> to vector<1x16x1x16x128xf32>
    tpu.vector_store %arg6[%c0_46, %c0_47, %c0_48, %c0_49, %c0_50], %56 {strides = array<i32>} : memref<1x16x2x16x128xf32, #tpu.memory_space<vmem>>, vector<1x16x1x16x128xf32>,
    %57 = vector.extract_strided_slice %51 {offsets = [0, 128], sizes = [256, 128], strides = [1, 1]} : vector<256x256xf32> to vector<256x128xf32>
    %58 = vector.shape_cast %57 : vector<256x128xf32> to vector<16x16x128xf32>
    %c0_51 = arith.constant 0 : index
    %c0_52 = arith.constant 0 : index
    %c1_53 = arith.constant 1 : index
    %c0_54 = arith.constant 0 : index
    %c0_55 = arith.constant 0 : index
    %59 = vector.load %arg6[%c0_51, %c0_52, %c1_53, %c0_54, %c0_55] : memref<1x16x2x16x128xf32, #tpu.memory_space<vmem>>, vector<1x16x1x16x128xf32>
    %60 = vector.shape_cast %59 : vector<1x16x1x16x128xf32> to vector<16x16x128xf32>
    %61 = vector.shape_cast %58 : vector<16x16x128xf32> to vector<1x16x1x16x128xf32>
    tpu.vector_store %arg6[%c0_51, %c0_52, %c1_53, %c0_54, %c0_55], %61 {strides = array<i32>} : memref<1x16x2x16x128xf32, #tpu.memory_space<vmem>>, vector<1x16x1x16x128xf32>,
    return
  }
  func.func @transform_0(%arg0: i32, %arg1: i32) -> (i32, i32, i32, i32, i32) {
    %c0_i32 = arith.constant 0 : i32
    %c0_i32_0 = arith.constant 0 : i32
    %c0_i32_1 = arith.constant 0 : i32
    %c0_i32_2 = arith.constant 0 : i32
    %c0_i32_3 = arith.constant 0 : i32
    return %arg0, %c0_i32, %c0_i32_0, %c0_i32_1, %c0_i32_2 : i32, i32, i32, i32, i32
  }
  func.func @transform_1(%arg0: i32, %arg1: i32) -> (i32, i32) {
    %c0_i32 = arith.constant 0 : i32
    %c0_i32_0 = arith.constant 0 : i32
    %c0_i32_1 = arith.constant 0 : i32
    return %c0_i32, %c0_i32_0 : i32, i32
  }
  func.func @transform_2(%arg0: i32, %arg1: i32) -> (i32, i32) {
    %c0_i32 = arith.constant 0 : i32
    %c0_i32_0 = arith.constant 0 : i32
    %c0_i32_1 = arith.constant 0 : i32
    return %c0_i32, %c0_i32_0 : i32, i32
  }
  func.func @transform_3(%arg0: i32, %arg1: i32) -> (i32, i32) {
    %c0_i32 = arith.constant 0 : i32
    %c0_i32_0 = arith.constant 0 : i32
    %c0_i32_1 = arith.constant 0 : i32
    return %c0_i32, %c0_i32_0 : i32, i32
  }
  func.func @transform_4(%arg0: i32, %arg1: i32) -> (i32, i32, i32, i32, i32) {
    %c0_i32 = arith.constant 0 : i32
    %c0_i32_0 = arith.constant 0 : i32
    %c0_i32_1 = arith.constant 0 : i32
    %c0_i32_2 = arith.constant 0 : i32
    return %arg0, %arg1, %c0_i32, %c0_i32_0, %c0_i32_1 : i32, i32, i32, i32, i32
  }
}

</mosaic_0001>

<llo_original>
// kernel: tpu_custom_call.1
$region0: #{tpu_custom_call.1}
  #allocation0 [shape = 'u32[]', space=smem, size = 0x4, offset = 0x4, fixed_abs, tag = 'smem constant byte address 0x4 - core index']
  #allocation1 [shape = 'u32[144,128]{1,0:T(1,128)}', space=vmem, size = 0x12000, scoped, tag = 'internal scratch']
  #allocation2 [shape = 'f32[1,1]{1,0:T(1,128)S(6)}', space=smem, size = 0x200, scoped, tag = 'scoped memory for tpu_custom_call.1']
  %s0 = inlined_call_operand.hbm [shape: bf16[2,3,18,16,64], index: 0, kind: input, shape index: {}]
  %s1 = inlined_call_operand.hbm [shape: bf16[576,256], index: 1, kind: input, shape index: {}]
  %s2 = inlined_call_operand.vmem [shape: f32[1,256], index: 2, kind: input, shape index: {}]
  %s3 = inlined_call_operand.<no memory space> [shape: f32[1,1], index: 3, kind: input, shape index: {}]
  %s4 = inlined_call_operand.hbm [shape: f32[2,16,2,16,128], index: 4, kind: output, shape index: {}]
  %s5 = sld [smem:[#allocation0]]
  $region57: #{tpu_custom_call.1} parent=0
    _
  %s7 = ssub.s32 1, %s5
  %s8 = scalar_select 0, %s7, %s5
  %9 = sst [smem:[#allocation2]] %s3
  $region1: #{tpu_custom_call.1} parent=0
    #allocation3 [shape = 'u8[442368]{0}', space=vmem, size = 0x6c000, scoped, tag = 'input window, operand 0']
    #allocation4 [shape = 's32[2]{0}', space=sflag, size = 0x8, scoped, tag = 'scoped memory for tpu_custom_call.1']
    #allocation5 [shape = 's32[2]{0}', space=sflag, size = 0x8, scoped, tag = 'scoped memory for tpu_custom_call.1']
    #allocation6 [shape = 'u8[294912]{0}', space=vmem, size = 0x48000, scoped, tag = 'input window, operand 1, single buffered']
    #allocation7 [shape = 's32[1]{0}', space=sflag, size = 0x4, scoped, tag = 'scoped memory for tpu_custom_call.1']
    #allocation8 [shape = 'u8[524288]{0}', space=vmem, size = 0x80000, scoped, tag = 'output window, operand 0']
    %10 = vsyncpa [#allocation4], 0
    %s11 = scalar_lea.sflag [#allocation4], 1
    %12 = vsyncpa %s11, 0
    %13 = vsyncpa [#allocation7], 0
    %14 = vsyncpa [#allocation5], 0
    %s15 = scalar_lea.sflag [#allocation5], 1
    %16 = vsyncpa %s15, 0
    loop: start=0, step=1, limit=4
    $region2: #{tpu_custom_call.1} parent=1 // loop_pre_header
      _
    $region3: #{tpu_custom_call.1} parent=1 // loop_header
      %s18 = sphi 0, %s22
      %p19 = scmp.ge.s32.totalorder %s18, 4
      %s25 = sphi 0, %s37
      %s26 = sphi 0, %s33
      %s27 = sphi 0, %s25
      %s28 = sphi 0, %s26
      %s29 = sphi 0, %s27
      %s30 = sphi 0, %s28
      %s40 = sphi 0, %s42
      %s43 = sphi 0, %s40
      %s44 = sphi 0, %s43
      %s60 = sphi 0, %s44
      %s64 = sphi 0, %s64
      %s66 = sphi 0, %s64
      %s67 = sphi 0, %s66
      %s81 = sphi 0, %s67
      %s85 = sphi 0, %s85
      %s87 = sphi 0, %s85
      %s88 = sphi 0, %s87
      %s102 = sphi 0, %s88
      %s106 = sphi 0, %s106
      %s108 = sphi 0, %s106
      %s109 = sphi 0, %s108
      %s123 = sphi 0, %s109
      %s131 = sphi 0, %s133
      %s134 = sphi 0, %s131
      %s135 = sphi 0, %s134
      %s151 = sphi 0, %s135
    $region4: #{tpu_custom_call.1} parent=1 // loop_header_branch
      %21 = sbr.rel (%p19) target = $region8
    $region5: #{tpu_custom_call.1} parent=1 // loop_body
      %s23 = ssub.s32 %s18, 1
      %s24 = ssub.s32 %s18, 2
      %s31 = sadd.s32 1, %s26
      %p32 = scmp.ge.s32.totalorder %s31, 1
      %s33 = scalar_select %p32, 0, %s31
      %s34 = sadd.s32 1, %s25
      %s35 = scalar_select %p32, %s34, %s25
      %p36 = scmp.ge.s32.totalorder %s35, 2
      %s37 = scalar_select %p36, 0, %s35
      %s38 = ssub.s32 %s25, %s37
      %p39 = scmp.eq.s32.totalorder %s38, 0
      %s41 = sadd.s32 %s40, 1
      %s42 = scalar_select %p39, %s40, %s41
      %p45 = pneg %p39
      %p46 = scmp.eq.s32.totalorder %s18, 1
      %p47 = por %p45, %p46
      %p48 = scmp.ne.s32.totalorder %s40, %s43
      %p49 = scmp.eq.s32.totalorder %s18, 0
      %p50 = por %p48, %p49
      %p51 = scmp.ne.s32.totalorder %s40, %s43
      %p52 = scmp.eq.s32.totalorder %s23, 1
      %p53 = por %p51, %p52
      %p54 = scmp.ne.s32.totalorder %s43, %s44
      %p55 = scmp.eq.s32.totalorder %s23, 0
      %p56 = por %p54, %p55
      %p57 = scmp.ne.s32.totalorder %s43, %s44
      %p58 = scmp.eq.s32.totalorder %s24, 1
      %p59 = por %p57, %p58
      %p61 = scmp.ne.s32.totalorder %s44, %s60
      %p62 = scmp.eq.s32.totalorder %s24, 0
      %p63 = por %p61, %p62
      %s65 = sadd.s32 %s64, 1
      %p68 = scmp.eq.s32.totalorder %s18, 1
      %p69 = scmp.ne.s32.totalorder %s64, %s66
      %p70 = scmp.eq.s32.totalorder %s18, 0
      %p71 = por %p69, %p70
      %p72 = scmp.ne.s32.totalorder %s64, %s66
      %p73 = scmp.eq.s32.totalorder %s23, 1
      %p74 = por %p72, %p73
      %p75 = scmp.ne.s32.totalorder %s66, %s67
      %p76 = scmp.eq.s32.totalorder %s23, 0
      %p77 = por %p75, %p76
      %p78 = scmp.ne.s32.totalorder %s66, %s67
      %p79 = scmp.eq.s32.totalorder %s24, 1
      %p80 = por %p78, %p79
      %p82 = scmp.ne.s32.totalorder %s67, %s81
      %p83 = scmp.eq.s32.totalorder %s24, 0
      %p84 = por %p82, %p83
      %s86 = sadd.s32 %s85, 1
      %p89 = scmp.eq.s32.totalorder %s18, 1
      %p90 = scmp.ne.s32.totalorder %s85, %s87
      %p91 = scmp.eq.s32.totalorder %s18, 0
      %p92 = por %p90, %p91
      %p93 = scmp.ne.s32.totalorder %s85, %s87
      %p94 = scmp.eq.s32.totalorder %s23, 1
      %p95 = por %p93, %p94
      %p96 = scmp.ne.s32.totalorder %s87, %s88
      %p97 = scmp.eq.s32.totalorder %s23, 0
      %p98 = por %p96, %p97
      %p99 = scmp.ne.s32.totalorder %s87, %s88
      %p100 = scmp.eq.s32.totalorder %s24, 1
      %p101 = por %p99, %p100
      %p103 = scmp.ne.s32.totalorder %s88, %s102
      %p104 = scmp.eq.s32.totalorder %s24, 0
      %p105 = por %p103, %p104
      %s107 = sadd.s32 %s106, 1
      %p110 = scmp.eq.s32.totalorder %s18, 1
      %p111 = scmp.ne.s32.totalorder %s106, %s108
      %p112 = scmp.eq.s32.totalorder %s18, 0
      %p113 = por %p111, %p112
      %p114 = scmp.ne.s32.totalorder %s106, %s108
      %p115 = scmp.eq.s32.totalorder %s23, 1
      %p116 = por %p114, %p115
      %p117 = scmp.ne.s32.totalorder %s108, %s109
      %p118 = scmp.eq.s32.totalorder %s23, 0
      %p119 = por %p117, %p118
      %p120 = scmp.ne.s32.totalorder %s108, %s109
      %p121 = scmp.eq.s32.totalorder %s24, 1
      %p122 = por %p120, %p121
      %p124 = scmp.ne.s32.totalorder %s109, %s123
      %p125 = scmp.eq.s32.totalorder %s24, 0
      %p126 = por %p124, %p125
      %s127 = ssub.s32 %s25, %s37
      %s128 = ssub.s32 %s26, %s33
      %s129 = sor.u32 %s127, %s128
      %p130 = scmp.eq.s32.totalorder %s129, 0
      %s132 = sadd.s32 %s131, 1
      %s133 = scalar_select %p130, %s131, %s132
      %p136 = pneg %p130
      %p137 = scmp.eq.s32.totalorder %s18, 1
      %p138 = por %p136, %p137
      %p139 = scmp.ne.s32.totalorder %s131, %s134
      %p140 = scmp.eq.s32.totalorder %s18, 0
      %p141 = por %p139, %p140
      %p142 = scmp.ne.s32.totalorder %s131, %s134
      %p143 = scmp.eq.s32.totalorder %s23, 1
      %p144 = por %p142, %p143
      %p145 = scmp.ne.s32.totalorder %s134, %s135
      %p146 = scmp.eq.s32.totalorder %s23, 0
      %p147 = por %p145, %p146
      %p148 = scmp.ne.s32.totalorder %s134, %s135
      %p149 = scmp.eq.s32.totalorder %s24, 1
      %p150 = por %p148, %p149
      %p152 = scmp.ne.s32.totalorder %s135, %s151
      %p153 = scmp.eq.s32.totalorder %s24, 0
      %p154 = por %p152, %p153
      %p155 = scmp.le.s32.totalorder 1, %s18
      %p156 = scmp.lt.s32.totalorder %s18, 3
      %p157 = pnand %p155, %p156
      %p158 = pneg %p157
      // Predicated region
      $region9: #{tpu_custom_call.1} parent=5 // pred_check
        _
      $region10: #{tpu_custom_call.1} parent=5 // pred_check_branch
        %160 = sbr.rel (%p157) target = $region12
      $region11: #{tpu_custom_call.1} parent=5 // pred_region
        %s161 = ssub.s32 %s18, 1
        // Predicated region
        $region13: #{tpu_custom_call.1} parent=11 // pred_check
          %p162 = pneg %p77
        $region14: #{tpu_custom_call.1} parent=11 // pred_check_branch
          %164 = sbr.rel (%p162) target = $region16
        $region15: #{tpu_custom_call.1} parent=11 // pred_region
          %s166 = ssub.s32 9216, 9216
          %167 = vsyncadd [#allocation7], %s166
          %s168 = sshll.u32 [#allocation6], 4
          %s169 = int_to_ptr.vmem [resolvable:$true] %s168
          %174 = dma.hbm_to_vmem [thread:$0]  %s1, 9216, %s169, [#allocation7], 128, 128, 8
        $region16: #{tpu_custom_call.1} parent=11 // pred_fallthru
          _
        // Predicated region
        $region17: #{tpu_custom_call.1} parent=11 // pred_check
          %p175 = pneg %p98
        $region18: #{tpu_custom_call.1} parent=11 // pred_check_branch
          %177 = sbr.rel (%p175) target = $region20
        $region19: #{tpu_custom_call.1} parent=11 // pred_region
          _
        $region20: #{tpu_custom_call.1} parent=11 // pred_fallthru
          _
        // Predicated region
        $region21: #{tpu_custom_call.1} parent=11 // pred_check
          %p178 = pneg %p119
        $region22: #{tpu_custom_call.1} parent=11 // pred_check_branch
          %180 = sbr.rel (%p178) target = $region24
        $region23: #{tpu_custom_call.1} parent=11 // pred_region
          _
        $region24: #{tpu_custom_call.1} parent=11 // pred_fallthru
          _
      $region12: #{tpu_custom_call.1} parent=5 // pred_fallthru
        _
      %p181 = scmp.lt.s32.totalorder %s18, 2
      // Predicated region
      $region25: #{tpu_custom_call.1} parent=5 // pred_check
        %p182 = pneg %p181
      $region26: #{tpu_custom_call.1} parent=5 // pred_check_branch
        %184 = sbr.rel (%p182) target = $region28
      $region27: #{tpu_custom_call.1} parent=5 // pred_region
        // Predicated region
        $region29: #{tpu_custom_call.1} parent=27 // pred_check
          %p185 = pneg %p50
        $region30: #{tpu_custom_call.1} parent=27 // pred_check_branch
          %187 = sbr.rel (%p185) target = $region32
        $region31: #{tpu_custom_call.1} parent=27 // pred_region
          %s188 = sand.u32 %s40, 1
          %s189 = scalar_lea.sflag [#allocation4], %s188
          %s190 = sand.u32 %s40, 1
          %s191 = smul.addr %s190, 432
          %s192 = scalar_lea.vmem [#allocation3], %s191
          %s194 = ssub.s32 6912, 6912
          %195 = vsyncadd %s189, %s194
          %s196 = smul.addr %s25, 108
          %s197 = smul.addr %s196, 64
          %s198 = scalar_lea.hbm %s0, %s197
          %s199 = sshll.u32 %s192, 4
          %s200 = int_to_ptr.vmem [resolvable:$true] %s199
          %205 = dma.hbm_to_vmem [thread:$0]  %s198, 6912, %s200, %s189, 64, 64, 4
        $region32: #{tpu_custom_call.1} parent=27 // pred_fallthru
          _
      $region28: #{tpu_custom_call.1} parent=5 // pred_fallthru
        _
      %p206 = scmp.le.s32.totalorder 1, %s18
      %p207 = scmp.lt.s32.totalorder %s18, 3
      %p208 = pnand %p206, %p207
      %p209 = pneg %p208
      // Predicated region
      $region33: #{tpu_custom_call.1} parent=5 // pred_check
        _
      $region34: #{tpu_custom_call.1} parent=5 // pred_check_branch
        %211 = sbr.rel (%p208) target = $region36
      $region35: #{tpu_custom_call.1} parent=5 // pred_region
        %s212 = ssub.s32 %s18, 1
        %s213 = sand.u32 %s43, 1
        %s214 = scalar_lea.sflag [#allocation4], %s213
        %s215 = sand.u32 %s43, 1
        %s216 = smul.addr %s215, 432
        %s217 = scalar_lea.vmem [#allocation3], %s216
        // Predicated region
        $region37: #{tpu_custom_call.1} parent=35 // pred_check
          %p218 = pneg %p56
        $region38: #{tpu_custom_call.1} parent=35 // pred_check_branch
          %220 = sbr.rel (%p218) target = $region40
        $region39: #{tpu_custom_call.1} parent=35 // pred_region
          %221 = dma.done %s214, 6912
        $region40: #{tpu_custom_call.1} parent=35 // pred_fallthru
          _
        // Predicated region
        $region41: #{tpu_custom_call.1} parent=35 // pred_check
          %p222 = pneg %p77
        $region42: #{tpu_custom_call.1} parent=35 // pred_check_branch
          %224 = sbr.rel (%p222) target = $region44
        $region43: #{tpu_custom_call.1} parent=35 // pred_region
          %225 = dma.done [#allocation7], 9216
        $region44: #{tpu_custom_call.1} parent=35 // pred_fallthru
          _
        %s226 = sand.u32 %s43, 1
        %s227 = scalar_lea.sflag [#allocation4], %s226
        %s228 = sand.u32 %s43, 1
        %s229 = smul.addr %s228, 432
        %s230 = scalar_lea.vmem [#allocation3], %s229
        %p231 = pneg %p56
        %p232 = pneg %p53
        %p233 = pneg %p77
        %p234 = pneg %p74
        %p235 = pneg %p98
        %p236 = pneg %p95
        %p237 = pneg %p119
        %p238 = pneg %p116
        %p239 = pneg %p147
        %p240 = pneg %p144
        %s241 = sand.u32 %s134, 1
        %s242 = scalar_lea.sflag [#allocation5], %s241
        %s243 = sand.u32 %s134, 1
        %s244 = smul.addr %s243, 512
        %s245 = scalar_lea.vmem [#allocation8], %s244
        %s246 = smul.u32 16, %s28
        %s248 = smul.u32 %s28, 16
        %s249 = smul.u32 %s248, 2
        %s250 = smul.addr %s249, 4
        %s251 = scalar_lea.vmem %s217, %s250 [#allocation3]
        %v252 = vld [vmem:[%s251] sm:$0xf]
        %v253 = vld [vmem:[%s251 + $0x4] sm:$0xf]
        %v254 = vld [vmem:[%s251 + $0x8] sm:$0xf]
        %v255 = vld [vmem:[%s251 + $0xc] sm:$0xf]
        %v256 = vld [vmem:[%s251 + $0x10] sm:$0xf]
        %v257 = vld [vmem:[%s251 + $0x14] sm:$0xf]
        %v258 = vld [vmem:[%s251 + $0x18] sm:$0xf]
        %v259 = vld [vmem:[%s251 + $0x1c] sm:$0xf]
        %v260 = vld [vmem:[%s251 + $0x20] sm:$0xf]
        %v261 = vld [vmem:[%s251 + $0x24] sm:$0xf]
        %v262 = vld [vmem:[%s251 + $0x28] sm:$0xf]
        %v263 = vld [vmem:[%s251 + $0x2c] sm:$0xf]
        %v264 = vld [vmem:[%s251 + $0x30] sm:$0xf]
        %v265 = vld [vmem:[%s251 + $0x34] sm:$0xf]
        %v266 = vld [vmem:[%s251 + $0x38] sm:$0xf]
        %v267 = vld [vmem:[%s251 + $0x3c] sm:$0xf]
        %v268 = vld [vmem:[%s251 + $0x40] sm:$0xf]
        %v269 = vld [vmem:[%s251 + $0x44] sm:$0xf]
        %v270 = vld [vmem:[%s251 + $0x48] sm:$0xf]
        %v271 = vld [vmem:[%s251 + $0x4c] sm:$0xf]
        %v272 = vld [vmem:[%s251 + $0x50] sm:$0xf]
        %v273 = vld [vmem:[%s251 + $0x54] sm:$0xf]
        %v274 = vld [vmem:[%s251 + $0x58] sm:$0xf]
        %v275 = vld [vmem:[%s251 + $0x5c] sm:$0xf]
        %v276 = vld [vmem:[%s251 + $0x60] sm:$0xf]
        %v277 = vld [vmem:[%s251 + $0x64] sm:$0xf]
        %v278 = vld [vmem:[%s251 + $0x68] sm:$0xf]
        %v279 = vld [vmem:[%s251 + $0x6c] sm:$0xf]
        %v280 = vld [vmem:[%s251 + $0x70] sm:$0xf]
        %v281 = vld [vmem:[%s251 + $0x74] sm:$0xf]
        %v282 = vld [vmem:[%s251 + $0x78] sm:$0xf]
        %v283 = vld [vmem:[%s251 + $0x7c] sm:$0xf]
        %s284 = sadd.s32 %s249, 36
        %s285 = smul.addr %s284, 4
        %s286 = scalar_lea.vmem %s217, %s285 [#allocation3]
        %v287 = vld [vmem:[%s286] sm:$0xf]
        %v288 = vld [vmem:[%s286 + $0x4] sm:$0xf]
        %v289 = vld [vmem:[%s286 + $0x8] sm:$0xf]
        %v290 = vld [vmem:[%s286 + $0xc] sm:$0xf]
        %v291 = vld [vmem:[%s286 + $0x10] sm:$0xf]
        %v292 = vld [vmem:[%s286 + $0x14] sm:$0xf]
        %v293 = vld [vmem:[%s286 + $0x18] sm:$0xf]
        %v294 = vld [vmem:[%s286 + $0x1c] sm:$0xf]
        %v295 = vld [vmem:[%s286 + $0x20] sm:$0xf]
        %v296 = vld [vmem:[%s286 + $0x24] sm:$0xf]
        %v297 = vld [vmem:[%s286 + $0x28] sm:$0xf]
        %v298 = vld [vmem:[%s286 + $0x2c] sm:$0xf]
        %v299 = vld [vmem:[%s286 + $0x30] sm:$0xf]
        %v300 = vld [vmem:[%s286 + $0x34] sm:$0xf]
        %v301 = vld [vmem:[%s286 + $0x38] sm:$0xf]
        %v302 = vld [vmem:[%s286 + $0x3c] sm:$0xf]
        %v303 = vld [vmem:[%s286 + $0x40] sm:$0xf]
        %v304 = vld [vmem:[%s286 + $0x44] sm:$0xf]
        %v305 = vld [vmem:[%s286 + $0x48] sm:$0xf]
        %v306 = vld [vmem:[%s286 + $0x4c] sm:$0xf]
        %v307 = vld [vmem:[%s286 + $0x50] sm:$0xf]
        %v308 = vld [vmem:[%s286 + $0x54] sm:$0xf]
        %v309 = vld [vmem:[%s286 + $0x58] sm:$0xf]
        %v310 = vld [vmem:[%s286 + $0x5c] sm:$0xf]
        %v311 = vld [vmem:[%s286 + $0x60] sm:$0xf]
        %v312 = vld [vmem:[%s286 + $0x64] sm:$0xf]
        %v313 = vld [vmem:[%s286 + $0x68] sm:$0xf]
        %v314 = vld [vmem:[%s286 + $0x6c] sm:$0xf]
        %v315 = vld [vmem:[%s286 + $0x70] sm:$0xf]
        %v316 = vld [vmem:[%s286 + $0x74] sm:$0xf]
        %v317 = vld [vmem:[%s286 + $0x78] sm:$0xf]
        %v318 = vld [vmem:[%s286 + $0x7c] sm:$0xf]
        %s319 = sadd.s32 %s249, 72
        %s320 = smul.addr %s319, 4
        %s321 = scalar_lea.vmem %s217, %s320 [#allocation3]
        %v322 = vld [vmem:[%s321] sm:$0xf]
        %v323 = vld [vmem:[%s321 + $0x4] sm:$0xf]
        %v324 = vld [vmem:[%s321 + $0x8] sm:$0xf]
        %v325 = vld [vmem:[%s321 + $0xc] sm:$0xf]
        %v326 = vld [vmem:[%s321 + $0x10] sm:$0xf]
        %v327 = vld [vmem:[%s321 + $0x14] sm:$0xf]
        %v328 = vld [vmem:[%s321 + $0x18] sm:$0xf]
        %v329 = vld [vmem:[%s321 + $0x1c] sm:$0xf]
        %v330 = vld [vmem:[%s321 + $0x20] sm:$0xf]
        %v331 = vld [vmem:[%s321 + $0x24] sm:$0xf]
        %v332 = vld [vmem:[%s321 + $0x28] sm:$0xf]
        %v333 = vld [vmem:[%s321 + $0x2c] sm:$0xf]
        %v334 = vld [vmem:[%s321 + $0x30] sm:$0xf]
        %v335 = vld [vmem:[%s321 + $0x34] sm:$0xf]
        %v336 = vld [vmem:[%s321 + $0x38] sm:$0xf]
        %v337 = vld [vmem:[%s321 + $0x3c] sm:$0xf]
        %v338 = vld [vmem:[%s321 + $0x40] sm:$0xf]
        %v339 = vld [vmem:[%s321 + $0x44] sm:$0xf]
        %v340 = vld [vmem:[%s321 + $0x48] sm:$0xf]
        %v341 = vld [vmem:[%s321 + $0x4c] sm:$0xf]
        %v342 = vld [vmem:[%s321 + $0x50] sm:$0xf]
        %v343 = vld [vmem:[%s321 + $0x54] sm:$0xf]
        %v344 = vld [vmem:[%s321 + $0x58] sm:$0xf]
        %v345 = vld [vmem:[%s321 + $0x5c] sm:$0xf]
        %v346 = vld [vmem:[%s321 + $0x60] sm:$0xf]
        %v347 = vld [vmem:[%s321 + $0x64] sm:$0xf]
        %v348 = vld [vmem:[%s321 + $0x68] sm:$0xf]
        %v349 = vld [vmem:[%s321 + $0x6c] sm:$0xf]
        %v350 = vld [vmem:[%s321 + $0x70] sm:$0xf]
        %v351 = vld [vmem:[%s321 + $0x74] sm:$0xf]
        %v352 = vld [vmem:[%s321 + $0x78] sm:$0xf]
        %v353 = vld [vmem:[%s321 + $0x7c] sm:$0xf]
        %s354 = sadd.s32 %s248, 1
        %s355 = smul.u32 %s354, 2
        %s356 = smul.addr %s355, 4
        %s357 = scalar_lea.vmem %s217, %s356 [#allocation3]
        %v358 = vld [vmem:[%s357] sm:$0xf]
        %v359 = vld [vmem:[%s357 + $0x4] sm:$0xf]
        %v360 = vld [vmem:[%s357 + $0x8] sm:$0xf]
        %v361 = vld [vmem:[%s357 + $0xc] sm:$0xf]
        %v362 = vld [vmem:[%s357 + $0x10] sm:$0xf]
        %v363 = vld [vmem:[%s357 + $0x14] sm:$0xf]
        %v364 = vld [vmem:[%s357 + $0x18] sm:$0xf]
        %v365 = vld [vmem:[%s357 + $0x1c] sm:$0xf]
        %v366 = vld [vmem:[%s357 + $0x20] sm:$0xf]
        %v367 = vld [vmem:[%s357 + $0x24] sm:$0xf]
        %v368 = vld [vmem:[%s357 + $0x28] sm:$0xf]
        %v369 = vld [vmem:[%s357 + $0x2c] sm:$0xf]
        %v370 = vld [vmem:[%s357 + $0x30] sm:$0xf]
        %v371 = vld [vmem:[%s357 + $0x34] sm:$0xf]
        %v372 = vld [vmem:[%s357 + $0x38] sm:$0xf]
        %v373 = vld [vmem:[%s357 + $0x3c] sm:$0xf]
        %v374 = vld [vmem:[%s357 + $0x40] sm:$0xf]
        %v375 = vld [vmem:[%s357 + $0x44] sm:$0xf]
        %v376 = vld [vmem:[%s357 + $0x48] sm:$0xf]
        %v377 = vld [vmem:[%s357 + $0x4c] sm:$0xf]
        %v378 = vld [vmem:[%s357 + $0x50] sm:$0xf]
        %v379 = vld [vmem:[%s357 + $0x54] sm:$0xf]
        %v380 = vld [vmem:[%s357 + $0x58] sm:$0xf]
        %v381 = vld [vmem:[%s357 + $0x5c] sm:$0xf]
        %v382 = vld [vmem:[%s357 + $0x60] sm:$0xf]
        %v383 = vld [vmem:[%s357 + $0x64] sm:$0xf]
        %v384 = vld [vmem:[%s357 + $0x68] sm:$0xf]
        %v385 = vld [vmem:[%s357 + $0x6c] sm:$0xf]
        %v386 = vld [vmem:[%s357 + $0x70] sm:$0xf]
        %v387 = vld [vmem:[%s357 + $0x74] sm:$0xf]
        %v388 = vld [vmem:[%s357 + $0x78] sm:$0xf]
        %v389 = vld [vmem:[%s357 + $0x7c] sm:$0xf]
        %s390 = sadd.s32 %s355, 36
        %s391 = smul.addr %s390, 4
        %s392 = scalar_lea.vmem %s217, %s391 [#allocation3]
        %v393 = vld [vmem:[%s392] sm:$0xf]
        %v394 = vld [vmem:[%s392 + $0x4] sm:$0xf]
        %v395 = vld [vmem:[%s392 + $0x8] sm:$0xf]
        %v396 = vld [vmem:[%s392 + $0xc] sm:$0xf]
        %v397 = vld [vmem:[%s392 + $0x10] sm:$0xf]
        %v398 = vld [vmem:[%s392 + $0x14] sm:$0xf]
        %v399 = vld [vmem:[%s392 + $0x18] sm:$0xf]
        %v400 = vld [vmem:[%s392 + $0x1c] sm:$0xf]
        %v401 = vld [vmem:[%s392 + $0x20] sm:$0xf]
        %v402 = vld [vmem:[%s392 + $0x24] sm:$0xf]
        %v403 = vld [vmem:[%s392 + $0x28] sm:$0xf]
        %v404 = vld [vmem:[%s392 + $0x2c] sm:$0xf]
        %v405 = vld [vmem:[%s392 + $0x30] sm:$0xf]
        %v406 = vld [vmem:[%s392 + $0x34] sm:$0xf]
        %v407 = vld [vmem:[%s392 + $0x38] sm:$0xf]
        %v408 = vld [vmem:[%s392 + $0x3c] sm:$0xf]
        %v409 = vld [vmem:[%s392 + $0x40] sm:$0xf]
        %v410 = vld [vmem:[%s392 + $0x44] sm:$0xf]
        %v411 = vld [vmem:[%s392 + $0x48] sm:$0xf]
        %v412 = vld [vmem:[%s392 + $0x4c] sm:$0xf]
        %v413 = vld [vmem:[%s392 + $0x50] sm:$0xf]
        %v414 = vld [vmem:[%s392 + $0x54] sm:$0xf]
        %v415 = vld [vmem:[%s392 + $0x58] sm:$0xf]
        %v416 = vld [vmem:[%s392 + $0x5c] sm:$0xf]
        %v417 = vld [vmem:[%s392 + $0x60] sm:$0xf]
        %v418 = vld [vmem:[%s392 + $0x64] sm:$0xf]
        %v419 = vld [vmem:[%s392 + $0x68] sm:$0xf]
        %v420 = vld [vmem:[%s392 + $0x6c] sm:$0xf]
        %v421 = vld [vmem:[%s392 + $0x70] sm:$0xf]
        %v422 = vld [vmem:[%s392 + $0x74] sm:$0xf]
        %v423 = vld [vmem:[%s392 + $0x78] sm:$0xf]
        %v424 = vld [vmem:[%s392 + $0x7c] sm:$0xf]
        %s425 = sadd.s32 %s355, 72
        %s426 = smul.addr %s425, 4
        %s427 = scalar_lea.vmem %s217, %s426 [#allocation3]
        %v428 = vld [vmem:[%s427] sm:$0xf]
        %v429 = vld [vmem:[%s427 + $0x4] sm:$0xf]
        %v430 = vld [vmem:[%s427 + $0x8] sm:$0xf]
        %v431 = vld [vmem:[%s427 + $0xc] sm:$0xf]
        %v432 = vld [vmem:[%s427 + $0x10] sm:$0xf]
        %v433 = vld [vmem:[%s427 + $0x14] sm:$0xf]
        %v434 = vld [vmem:[%s427 + $0x18] sm:$0xf]
        %v435 = vld [vmem:[%s427 + $0x1c] sm:$0xf]
        %v436 = vld [vmem:[%s427 + $0x20] sm:$0xf]
        %v437 = vld [vmem:[%s427 + $0x24] sm:$0xf]
        %v438 = vld [vmem:[%s427 + $0x28] sm:$0xf]
        %v439 = vld [vmem:[%s427 + $0x2c] sm:$0xf]
        %v440 = vld [vmem:[%s427 + $0x30] sm:$0xf]
        %v441 = vld [vmem:[%s427 + $0x34] sm:$0xf]
        %v442 = vld [vmem:[%s427 + $0x38] sm:$0xf]
        %v443 = vld [vmem:[%s427 + $0x3c] sm:$0xf]
        %v444 = vld [vmem:[%s427 + $0x40] sm:$0xf]
        %v445 = vld [vmem:[%s427 + $0x44] sm:$0xf]
        %v446 = vld [vmem:[%s427 + $0x48] sm:$0xf]
        %v447 = vld [vmem:[%s427 + $0x4c] sm:$0xf]
        %v448 = vld [vmem:[%s427 + $0x50] sm:$0xf]
        %v449 = vld [vmem:[%s427 + $0x54] sm:$0xf]
        %v450 = vld [vmem:[%s427 + $0x58] sm:$0xf]
        %v451 = vld [vmem:[%s427 + $0x5c] sm:$0xf]
        %v452 = vld [vmem:[%s427 + $0x60] sm:$0xf]
        %v453 = vld [vmem:[%s427 + $0x64] sm:$0xf]
        %v454 = vld [vmem:[%s427 + $0x68] sm:$0xf]
        %v455 = vld [vmem:[%s427 + $0x6c] sm:$0xf]
        %v456 = vld [vmem:[%s427 + $0x70] sm:$0xf]
        %v457 = vld [vmem:[%s427 + $0x74] sm:$0xf]
        %v458 = vld [vmem:[%s427 + $0x78] sm:$0xf]
        %v459 = vld [vmem:[%s427 + $0x7c] sm:$0xf]
        %s460 = sadd.s32 %s248, 2
        %s461 = smul.u32 %s460, 2
        %s462 = smul.addr %s461, 4
        %s463 = scalar_lea.vmem %s217, %s462 [#allocation3]
        %v464 = vld [vmem:[%s463] sm:$0xf]
        %v465 = vld [vmem:[%s463 + $0x4] sm:$0xf]
        %v466 = vld [vmem:[%s463 + $0x8] sm:$0xf]
        %v467 = vld [vmem:[%s463 + $0xc] sm:$0xf]
        %v468 = vld [vmem:[%s463 + $0x10] sm:$0xf]
        %v469 = vld [vmem:[%s463 + $0x14] sm:$0xf]
        %v470 = vld [vmem:[%s463 + $0x18] sm:$0xf]
        %v471 = vld [vmem:[%s463 + $0x1c] sm:$0xf]
        %v472 = vld [vmem:[%s463 + $0x20] sm:$0xf]
        %v473 = vld [vmem:[%s463 + $0x24] sm:$0xf]
        %v474 = vld [vmem:[%s463 + $0x28] sm:$0xf]
        %v475 = vld [vmem:[%s463 + $0x2c] sm:$0xf]
        %v476 = vld [vmem:[%s463 + $0x30] sm:$0xf]
        %v477 = vld [vmem:[%s463 + $0x34] sm:$0xf]
        %v478 = vld [vmem:[%s463 + $0x38] sm:$0xf]
        %v479 = vld [vmem:[%s463 + $0x3c] sm:$0xf]
        %v480 = vld [vmem:[%s463 + $0x40] sm:$0xf]
        %v481 = vld [vmem:[%s463 + $0x44] sm:$0xf]
        %v482 = vld [vmem:[%s463 + $0x48] sm:$0xf]
        %v483 = vld [vmem:[%s463 + $0x4c] sm:$0xf]
        %v484 = vld [vmem:[%s463 + $0x50] sm:$0xf]
        %v485 = vld [vmem:[%s463 + $0x54] sm:$0xf]
        %v486 = vld [vmem:[%s463 + $0x58] sm:$0xf]
        %v487 = vld [vmem:[%s463 + $0x5c] sm:$0xf]
        %v488 = vld [vmem:[%s463 + $0x60] sm:$0xf]
        %v489 = vld [vmem:[%s463 + $0x64] sm:$0xf]
        %v490 = vld [vmem:[%s463 + $0x68] sm:$0xf]
        %v491 = vld [vmem:[%s463 + $0x6c] sm:$0xf]
        %v492 = vld [vmem:[%s463 + $0x70] sm:$0xf]
        %v493 = vld [vmem:[%s463 + $0x74] sm:$0xf]
        %v494 = vld [vmem:[%s463 + $0x78] sm:$0xf]
        %v495 = vld [vmem:[%s463 + $0x7c] sm:$0xf]
        %s496 = sadd.s32 %s461, 36
        %s497 = smul.addr %s496, 4
        %s498 = scalar_lea.vmem %s217, %s497 [#allocation3]
        %v499 = vld [vmem:[%s498] sm:$0xf]
        %v500 = vld [vmem:[%s498 + $0x4] sm:$0xf]
        %v501 = vld [vmem:[%s498 + $0x8] sm:$0xf]
        %v502 = vld [vmem:[%s498 + $0xc] sm:$0xf]
        %v503 = vld [vmem:[%s498 + $0x10] sm:$0xf]
        %v504 = vld [vmem:[%s498 + $0x14] sm:$0xf]
        %v505 = vld [vmem:[%s498 + $0x18] sm:$0xf]
        %v506 = vld [vmem:[%s498 + $0x1c] sm:$0xf]
        %v507 = vld [vmem:[%s498 + $0x20] sm:$0xf]
        %v508 = vld [vmem:[%s498 + $0x24] sm:$0xf]
        %v509 = vld [vmem:[%s498 + $0x28] sm:$0xf]
        %v510 = vld [vmem:[%s498 + $0x2c] sm:$0xf]
        %v511 = vld [vmem:[%s498 + $0x30] sm:$0xf]
        %v512 = vld [vmem:[%s498 + $0x34] sm:$0xf]
        %v513 = vld [vmem:[%s498 + $0x38] sm:$0xf]
        %v514 = vld [vmem:[%s498 + $0x3c] sm:$0xf]
        %v515 = vld [vmem:[%s498 + $0x40] sm:$0xf]
        %v516 = vld [vmem:[%s498 + $0x44] sm:$0xf]
        %v517 = vld [vmem:[%s498 + $0x48] sm:$0xf]
        %v518 = vld [vmem:[%s498 + $0x4c] sm:$0xf]
        %v519 = vld [vmem:[%s498 + $0x50] sm:$0xf]
        %v520 = vld [vmem:[%s498 + $0x54] sm:$0xf]
        %v521 = vld [vmem:[%s498 + $0x58] sm:$0xf]
        %v522 = vld [vmem:[%s498 + $0x5c] sm:$0xf]
        %v523 = vld [vmem:[%s498 + $0x60] sm:$0xf]
        %v524 = vld [vmem:[%s498 + $0x64] sm:$0xf]
        %v525 = vld [vmem:[%s498 + $0x68] sm:$0xf]
        %v526 = vld [vmem:[%s498 + $0x6c] sm:$0xf]
        %v527 = vld [vmem:[%s498 + $0x70] sm:$0xf]
        %v528 = vld [vmem:[%s498 + $0x74] sm:$0xf]
        %v529 = vld [vmem:[%s498 + $0x78] sm:$0xf]
        %v530 = vld [vmem:[%s498 + $0x7c] sm:$0xf]
        %s531 = sadd.s32 %s461, 72
        %s532 = smul.addr %s531, 4
        %s533 = scalar_lea.vmem %s217, %s532 [#allocation3]
        %v534 = vld [vmem:[%s533] sm:$0xf]
        %v535 = vld [vmem:[%s533 + $0x4] sm:$0xf]
        %v536 = vld [vmem:[%s533 + $0x8] sm:$0xf]
        %v537 = vld [vmem:[%s533 + $0xc] sm:$0xf]
        %v538 = vld [vmem:[%s533 + $0x10] sm:$0xf]
        %v539 = vld [vmem:[%s533 + $0x14] sm:$0xf]
        %v540 = vld [vmem:[%s533 + $0x18] sm:$0xf]
        %v541 = vld [vmem:[%s533 + $0x1c] sm:$0xf]
        %v542 = vld [vmem:[%s533 + $0x20] sm:$0xf]
        %v543 = vld [vmem:[%s533 + $0x24] sm:$0xf]
        %v544 = vld [vmem:[%s533 + $0x28] sm:$0xf]
        %v545 = vld [vmem:[%s533 + $0x2c] sm:$0xf]
        %v546 = vld [vmem:[%s533 + $0x30] sm:$0xf]
        %v547 = vld [vmem:[%s533 + $0x34] sm:$0xf]
        %v548 = vld [vmem:[%s533 + $0x38] sm:$0xf]
        %v549 = vld [vmem:[%s533 + $0x3c] sm:$0xf]
        %v550 = vld [vmem:[%s533 + $0x40] sm:$0xf]
        %v551 = vld [vmem:[%s533 + $0x44] sm:$0xf]
        %v552 = vld [vmem:[%s533 + $0x48] sm:$0xf]
        %v553 = vld [vmem:[%s533 + $0x4c] sm:$0xf]
        %v554 = vld [vmem:[%s533 + $0x50] sm:$0xf]
        %v555 = vld [vmem:[%s533 + $0x54] sm:$0xf]
        %v556 = vld [vmem:[%s533 + $0x58] sm:$0xf]
        %v557 = vld [vmem:[%s533 + $0x5c] sm:$0xf]
        %v558 = vld [vmem:[%s533 + $0x60] sm:$0xf]
        %v559 = vld [vmem:[%s533 + $0x64] sm:$0xf]
        %v560 = vld [vmem:[%s533 + $0x68] sm:$0xf]
        %v561 = vld [vmem:[%s533 + $0x6c] sm:$0xf]
        %v562 = vld [vmem:[%s533 + $0x70] sm:$0xf]
        %v563 = vld [vmem:[%s533 + $0x74] sm:$0xf]
        %v564 = vld [vmem:[%s533 + $0x78] sm:$0xf]
        %v565 = vld [vmem:[%s533 + $0x7c] sm:$0xf]
        %v598 = vunpack.c.l.b16 %v252
        %v599 = vunpack.c.l.b16 %v253
        %v600 = vunpack.c.l.b16 %v254
        %v601 = vunpack.c.l.b16 %v255
        %v602 = vunpack.c.l.b16 %v256
        %v603 = vunpack.c.l.b16 %v257
        %v604 = vunpack.c.l.b16 %v258
        %v605 = vunpack.c.l.b16 %v259
        %v606 = vunpack.c.l.b16 %v260
        %v607 = vunpack.c.l.b16 %v261
        %v608 = vunpack.c.l.b16 %v262
        %v609 = vunpack.c.l.b16 %v263
        %v610 = vunpack.c.l.b16 %v264
        %v611 = vunpack.c.l.b16 %v265
        %v612 = vunpack.c.l.b16 %v266
        %v613 = vunpack.c.l.b16 %v267
        %v614 = vunpack.c.l.b16 %v268
        %v615 = vunpack.c.l.b16 %v269
        %v616 = vunpack.c.l.b16 %v270
        %v617 = vunpack.c.l.b16 %v271
        %v618 = vunpack.c.l.b16 %v272
        %v619 = vunpack.c.l.b16 %v273
        %v620 = vunpack.c.l.b16 %v274
        %v621 = vunpack.c.l.b16 %v275
        %v622 = vunpack.c.l.b16 %v276
        %v623 = vunpack.c.l.b16 %v277
        %v624 = vunpack.c.l.b16 %v278
        %v625 = vunpack.c.l.b16 %v279
        %v626 = vunpack.c.l.b16 %v280
        %v627 = vunpack.c.l.b16 %v281
        %v628 = vunpack.c.l.b16 %v282
        %v629 = vunpack.c.l.b16 %v283
        %v630 = vpack.c.b16 %v599, %v598
        %v631 = vpack.c.b16 %v601, %v600
        %v632 = vpack.c.b16 %v603, %v602
        %v633 = vpack.c.b16 %v605, %v604
        %v634 = vpack.c.b16 %v607, %v606
        %v635 = vpack.c.b16 %v609, %v608
        %v636 = vpack.c.b16 %v611, %v610
        %v637 = vpack.c.b16 %v613, %v612
        %v638 = vpack.c.b16 %v615, %v614
        %v639 = vpack.c.b16 %v617, %v616
        %v640 = vpack.c.b16 %v619, %v618
        %v641 = vpack.c.b16 %v621, %v620
        %v642 = vpack.c.b16 %v623, %v622
        %v643 = vpack.c.b16 %v625, %v624
        %v644 = vpack.c.b16 %v627, %v626
        %v645 = vpack.c.b16 %v629, %v628
        %v678 = vunpack.c.l.b16 %v287
        %v679 = vunpack.c.l.b16 %v288
        %v680 = vunpack.c.l.b16 %v289
        %v681 = vunpack.c.l.b16 %v290
        %v682 = vunpack.c.l.b16 %v291
        %v683 = vunpack.c.l.b16 %v292
        %v684 = vunpack.c.l.b16 %v293
        %v685 = vunpack.c.l.b16 %v294
        %v686 = vunpack.c.l.b16 %v295
        %v687 = vunpack.c.l.b16 %v296
        %v688 = vunpack.c.l.b16 %v297
        %v689 = vunpack.c.l.b16 %v298
        %v690 = vunpack.c.l.b16 %v299
        %v691 = vunpack.c.l.b16 %v300
        %v692 = vunpack.c.l.b16 %v301
        %v693 = vunpack.c.l.b16 %v302
        %v694 = vunpack.c.l.b16 %v303
        %v695 = vunpack.c.l.b16 %v304
        %v696 = vunpack.c.l.b16 %v305
        %v697 = vunpack.c.l.b16 %v306
        %v698 = vunpack.c.l.b16 %v307
        %v699 = vunpack.c.l.b16 %v308
        %v700 = vunpack.c.l.b16 %v309
        %v701 = vunpack.c.l.b16 %v310
        %v702 = vunpack.c.l.b16 %v311
        %v703 = vunpack.c.l.b16 %v312
        %v704 = vunpack.c.l.b16 %v313
        %v705 = vunpack.c.l.b16 %v314
        %v706 = vunpack.c.l.b16 %v315
        %v707 = vunpack.c.l.b16 %v316
        %v708 = vunpack.c.l.b16 %v317
        %v709 = vunpack.c.l.b16 %v318
        %v710 = vpack.c.b16 %v679, %v678
        %v711 = vpack.c.b16 %v681, %v680
        %v712 = vpack.c.b16 %v683, %v682
        %v713 = vpack.c.b16 %v685, %v684
        %v714 = vpack.c.b16 %v687, %v686
        %v715 = vpack.c.b16 %v689, %v688
        %v716 = vpack.c.b16 %v691, %v690
        %v717 = vpack.c.b16 %v693, %v692
        %v718 = vpack.c.b16 %v695, %v694
        %v719 = vpack.c.b16 %v697, %v696
        %v720 = vpack.c.b16 %v699, %v698
        %v721 = vpack.c.b16 %v701, %v700
        %v722 = vpack.c.b16 %v703, %v702
        %v723 = vpack.c.b16 %v705, %v704
        %v724 = vpack.c.b16 %v707, %v706
        %v725 = vpack.c.b16 %v709, %v708
        %726 = vrot.lane.b32.xlu0 %v710, 64
        %v727 = vpop.permute.xlu0 %726
        %728 = vrot.lane.b32.xlu0 %v711, 64
        %v729 = vpop.permute.xlu0 %728
        %730 = vrot.lane.b32.xlu0 %v712, 64
        %v731 = vpop.permute.xlu0 %730
        %732 = vrot.lane.b32.xlu0 %v713, 64
        %v733 = vpop.permute.xlu0 %732
        %734 = vrot.lane.b32.xlu0 %v714, 64
        %v735 = vpop.permute.xlu0 %734
        %736 = vrot.lane.b32.xlu0 %v715, 64
        %v737 = vpop.permute.xlu0 %736
        %738 = vrot.lane.b32.xlu0 %v716, 64
        %v739 = vpop.permute.xlu0 %738
        %740 = vrot.lane.b32.xlu0 %v717, 64
        %v741 = vpop.permute.xlu0 %740
        %742 = vrot.lane.b32.xlu0 %v718, 64
        %v743 = vpop.permute.xlu0 %742
        %744 = vrot.lane.b32.xlu0 %v719, 64
        %v745 = vpop.permute.xlu0 %744
        %746 = vrot.lane.b32.xlu0 %v720, 64
        %v747 = vpop.permute.xlu0 %746
        %748 = vrot.lane.b32.xlu0 %v721, 64
        %v749 = vpop.permute.xlu0 %748
        %750 = vrot.lane.b32.xlu0 %v722, 64
        %v751 = vpop.permute.xlu0 %750
        %752 = vrot.lane.b32.xlu0 %v723, 64
        %v753 = vpop.permute.xlu0 %752
        %754 = vrot.lane.b32.xlu0 %v724, 64
        %v755 = vpop.permute.xlu0 %754
        %756 = vrot.lane.b32.xlu0 %v725, 64
        %v757 = vpop.permute.xlu0 %756
        %v790 = vunpack.c.l.b16 %v322
        %v791 = vunpack.c.l.b16 %v323
        %v792 = vunpack.c.l.b16 %v324
        %v793 = vunpack.c.l.b16 %v325
        %v794 = vunpack.c.l.b16 %v326
        %v795 = vunpack.c.l.b16 %v327
        %v796 = vunpack.c.l.b16 %v328
        %v797 = vunpack.c.l.b16 %v329
        %v798 = vunpack.c.l.b16 %v330
        %v799 = vunpack.c.l.b16 %v331
        %v800 = vunpack.c.l.b16 %v332
        %v801 = vunpack.c.l.b16 %v333
        %v802 = vunpack.c.l.b16 %v334
        %v803 = vunpack.c.l.b16 %v335
        %v804 = vunpack.c.l.b16 %v336
        %v805 = vunpack.c.l.b16 %v337
        %v806 = vunpack.c.l.b16 %v338
        %v807 = vunpack.c.l.b16 %v339
        %v808 = vunpack.c.l.b16 %v340
        %v809 = vunpack.c.l.b16 %v341
        %v810 = vunpack.c.l.b16 %v342
        %v811 = vunpack.c.l.b16 %v343
        %v812 = vunpack.c.l.b16 %v344
        %v813 = vunpack.c.l.b16 %v345
        %v814 = vunpack.c.l.b16 %v346
        %v815 = vunpack.c.l.b16 %v347
        %v816 = vunpack.c.l.b16 %v348
        %v817 = vunpack.c.l.b16 %v349
        %v818 = vunpack.c.l.b16 %v350
        %v819 = vunpack.c.l.b16 %v351
        %v820 = vunpack.c.l.b16 %v352
        %v821 = vunpack.c.l.b16 %v353
        %v822 = vpack.c.b16 %v791, %v790
        %v823 = vpack.c.b16 %v793, %v792
        %v824 = vpack.c.b16 %v795, %v794
        %v825 = vpack.c.b16 %v797, %v796
        %v826 = vpack.c.b16 %v799, %v798
        %v827 = vpack.c.b16 %v801, %v800
        %v828 = vpack.c.b16 %v803, %v802
        %v829 = vpack.c.b16 %v805, %v804
        %v830 = vpack.c.b16 %v807, %v806
        %v831 = vpack.c.b16 %v809, %v808
        %v832 = vpack.c.b16 %v811, %v810
        %v833 = vpack.c.b16 %v813, %v812
        %v834 = vpack.c.b16 %v815, %v814
        %v835 = vpack.c.b16 %v817, %v816
        %v836 = vpack.c.b16 %v819, %v818
        %v837 = vpack.c.b16 %v821, %v820
        %v870 = vunpack.c.l.b16 %v358
        %v871 = vunpack.c.l.b16 %v359
        %v872 = vunpack.c.l.b16 %v360
        %v873 = vunpack.c.l.b16 %v361
        %v874 = vunpack.c.l.b16 %v362
        %v875 = vunpack.c.l.b16 %v363
        %v876 = vunpack.c.l.b16 %v364
        %v877 = vunpack.c.l.b16 %v365
        %v878 = vunpack.c.l.b16 %v366
        %v879 = vunpack.c.l.b16 %v367
        %v880 = vunpack.c.l.b16 %v368
        %v881 = vunpack.c.l.b16 %v369
        %v882 = vunpack.c.l.b16 %v370
        %v883 = vunpack.c.l.b16 %v371
        %v884 = vunpack.c.l.b16 %v372
        %v885 = vunpack.c.l.b16 %v373
        %v886 = vunpack.c.l.b16 %v374
        %v887 = vunpack.c.l.b16 %v375
        %v888 = vunpack.c.l.b16 %v376
        %v889 = vunpack.c.l.b16 %v377
        %v890 = vunpack.c.l.b16 %v378
        %v891 = vunpack.c.l.b16 %v379
        %v892 = vunpack.c.l.b16 %v380
        %v893 = vunpack.c.l.b16 %v381
        %v894 = vunpack.c.l.b16 %v382
        %v895 = vunpack.c.l.b16 %v383
        %v896 = vunpack.c.l.b16 %v384
        %v897 = vunpack.c.l.b16 %v385
        %v898 = vunpack.c.l.b16 %v386
        %v899 = vunpack.c.l.b16 %v387
        %v900 = vunpack.c.l.b16 %v388
        %v901 = vunpack.c.l.b16 %v389
        %v902 = vpack.c.b16 %v871, %v870
        %v903 = vpack.c.b16 %v873, %v872
        %v904 = vpack.c.b16 %v875, %v874
        %v905 = vpack.c.b16 %v877, %v876
        %v906 = vpack.c.b16 %v879, %v878
        %v907 = vpack.c.b16 %v881, %v880
        %v908 = vpack.c.b16 %v883, %v882
        %v909 = vpack.c.b16 %v885, %v884
        %v910 = vpack.c.b16 %v887, %v886
        %v911 = vpack.c.b16 %v889, %v888
        %v912 = vpack.c.b16 %v891, %v890
        %v913 = vpack.c.b16 %v893, %v892
        %v914 = vpack.c.b16 %v895, %v894
        %v915 = vpack.c.b16 %v897, %v896
        %v916 = vpack.c.b16 %v899, %v898
        %v917 = vpack.c.b16 %v901, %v900
        %918 = vrot.lane.b32.xlu0 %v902, 64
        %v919 = vpop.permute.xlu0 %918
        %920 = vrot.lane.b32.xlu0 %v903, 64
        %v921 = vpop.permute.xlu0 %920
        %922 = vrot.lane.b32.xlu0 %v904, 64
        %v923 = vpop.permute.xlu0 %922
        %924 = vrot.lane.b32.xlu0 %v905, 64
        %v925 = vpop.permute.xlu0 %924
        %926 = vrot.lane.b32.xlu0 %v906, 64
        %v927 = vpop.permute.xlu0 %926
        %928 = vrot.lane.b32.xlu0 %v907, 64
        %v929 = vpop.permute.xlu0 %928
        %930 = vrot.lane.b32.xlu0 %v908, 64
        %v931 = vpop.permute.xlu0 %930
        %932 = vrot.lane.b32.xlu0 %v909, 64
        %v933 = vpop.permute.xlu0 %932
        %934 = vrot.lane.b32.xlu0 %v910, 64
        %v935 = vpop.permute.xlu0 %934
        %936 = vrot.lane.b32.xlu0 %v911, 64
        %v937 = vpop.permute.xlu0 %936
        %938 = vrot.lane.b32.xlu0 %v912, 64
        %v939 = vpop.permute.xlu0 %938
        %940 = vrot.lane.b32.xlu0 %v913, 64
        %v941 = vpop.permute.xlu0 %940
        %942 = vrot.lane.b32.xlu0 %v914, 64
        %v943 = vpop.permute.xlu0 %942
        %944 = vrot.lane.b32.xlu0 %v915, 64
        %v945 = vpop.permute.xlu0 %944
        %946 = vrot.lane.b32.xlu0 %v916, 64
        %v947 = vpop.permute.xlu0 %946
        %948 = vrot.lane.b32.xlu0 %v917, 64
        %v949 = vpop.permute.xlu0 %948
        %v982 = vunpack.c.l.b16 %v393
        %v983 = vunpack.c.l.b16 %v394
        %v984 = vunpack.c.l.b16 %v395
        %v985 = vunpack.c.l.b16 %v396
        %v986 = vunpack.c.l.b16 %v397
        %v987 = vunpack.c.l.b16 %v398
        %v988 = vunpack.c.l.b16 %v399
        %v989 = vunpack.c.l.b16 %v400
        %v990 = vunpack.c.l.b16 %v401
        %v991 = vunpack.c.l.b16 %v402
        %v992 = vunpack.c.l.b16 %v403
        %v993 = vunpack.c.l.b16 %v404
        %v994 = vunpack.c.l.b16 %v405
        %v995 = vunpack.c.l.b16 %v406
        %v996 = vunpack.c.l.b16 %v407
        %v997 = vunpack.c.l.b16 %v408
        %v998 = vunpack.c.l.b16 %v409
        %v999 = vunpack.c.l.b16 %v410
        %v1000 = vunpack.c.l.b16 %v411
        %v1001 = vunpack.c.l.b16 %v412
        %v1002 = vunpack.c.l.b16 %v413
        %v1003 = vunpack.c.l.b16 %v414
        %v1004 = vunpack.c.l.b16 %v415
        %v1005 = vunpack.c.l.b16 %v416
        %v1006 = vunpack.c.l.b16 %v417
        %v1007 = vunpack.c.l.b16 %v418
        %v1008 = vunpack.c.l.b16 %v419
        %v1009 = vunpack.c.l.b16 %v420
        %v1010 = vunpack.c.l.b16 %v421
        %v1011 = vunpack.c.l.b16 %v422
        %v1012 = vunpack.c.l.b16 %v423
        %v1013 = vunpack.c.l.b16 %v424
        %v1014 = vpack.c.b16 %v983, %v982
        %v1015 = vpack.c.b16 %v985, %v984
        %v1016 = vpack.c.b16 %v987, %v986
        %v1017 = vpack.c.b16 %v989, %v988
        %v1018 = vpack.c.b16 %v991, %v990
        %v1019 = vpack.c.b16 %v993, %v992
        %v1020 = vpack.c.b16 %v995, %v994
        %v1021 = vpack.c.b16 %v997, %v996
        %v1022 = vpack.c.b16 %v999, %v998
        %v1023 = vpack.c.b16 %v1001, %v1000
        %v1024 = vpack.c.b16 %v1003, %v1002
        %v1025 = vpack.c.b16 %v1005, %v1004
        %v1026 = vpack.c.b16 %v1007, %v1006
        %v1027 = vpack.c.b16 %v1009, %v1008
        %v1028 = vpack.c.b16 %v1011, %v1010
        %v1029 = vpack.c.b16 %v1013, %v1012
        %v1062 = vunpack.c.l.b16 %v428
        %v1063 = vunpack.c.l.b16 %v429
        %v1064 = vunpack.c.l.b16 %v430
        %v1065 = vunpack.c.l.b16 %v431
        %v1066 = vunpack.c.l.b16 %v432
        %v1067 = vunpack.c.l.b16 %v433
        %v1068 = vunpack.c.l.b16 %v434
        %v1069 = vunpack.c.l.b16 %v435
        %v1070 = vunpack.c.l.b16 %v436
        %v1071 = vunpack.c.l.b16 %v437
        %v1072 = vunpack.c.l.b16 %v438
        %v1073 = vunpack.c.l.b16 %v439
        %v1074 = vunpack.c.l.b16 %v440
        %v1075 = vunpack.c.l.b16 %v441
        %v1076 = vunpack.c.l.b16 %v442
        %v1077 = vunpack.c.l.b16 %v443
        %v1078 = vunpack.c.l.b16 %v444
        %v1079 = vunpack.c.l.b16 %v445
        %v1080 = vunpack.c.l.b16 %v446
        %v1081 = vunpack.c.l.b16 %v447
        %v1082 = vunpack.c.l.b16 %v448
        %v1083 = vunpack.c.l.b16 %v449
        %v1084 = vunpack.c.l.b16 %v450
        %v1085 = vunpack.c.l.b16 %v451
        %v1086 = vunpack.c.l.b16 %v452
        %v1087 = vunpack.c.l.b16 %v453
        %v1088 = vunpack.c.l.b16 %v454
        %v1089 = vunpack.c.l.b16 %v455
        %v1090 = vunpack.c.l.b16 %v456
        %v1091 = vunpack.c.l.b16 %v457
        %v1092 = vunpack.c.l.b16 %v458
        %v1093 = vunpack.c.l.b16 %v459
        %v1094 = vpack.c.b16 %v1063, %v1062
        %v1095 = vpack.c.b16 %v1065, %v1064
        %v1096 = vpack.c.b16 %v1067, %v1066
        %v1097 = vpack.c.b16 %v1069, %v1068
        %v1098 = vpack.c.b16 %v1071, %v1070
        %v1099 = vpack.c.b16 %v1073, %v1072
        %v1100 = vpack.c.b16 %v1075, %v1074
        %v1101 = vpack.c.b16 %v1077, %v1076
        %v1102 = vpack.c.b16 %v1079, %v1078
        %v1103 = vpack.c.b16 %v1081, %v1080
        %v1104 = vpack.c.b16 %v1083, %v1082
        %v1105 = vpack.c.b16 %v1085, %v1084
        %v1106 = vpack.c.b16 %v1087, %v1086
        %v1107 = vpack.c.b16 %v1089, %v1088
        %v1108 = vpack.c.b16 %v1091, %v1090
        %v1109 = vpack.c.b16 %v1093, %v1092
        %1110 = vrot.lane.b32.xlu0 %v1094, 64
        %v1111 = vpop.permute.xlu0 %1110
        %1112 = vrot.lane.b32.xlu0 %v1095, 64
        %v1113 = vpop.permute.xlu0 %1112
        %1114 = vrot.lane.b32.xlu0 %v1096, 64
        %v1115 = vpop.permute.xlu0 %1114
        %1116 = vrot.lane.b32.xlu0 %v1097, 64
        %v1117 = vpop.permute.xlu0 %1116
        %1118 = vrot.lane.b32.xlu0 %v1098, 64
        %v1119 = vpop.permute.xlu0 %1118
        %1120 = vrot.lane.b32.xlu0 %v1099, 64
        %v1121 = vpop.permute.xlu0 %1120
        %1122 = vrot.lane.b32.xlu0 %v1100, 64
        %v1123 = vpop.permute.xlu0 %1122
        %1124 = vrot.lane.b32.xlu0 %v1101, 64
        %v1125 = vpop.permute.xlu0 %1124
        %1126 = vrot.lane.b32.xlu0 %v1102, 64
        %v1127 = vpop.permute.xlu0 %1126
        %1128 = vrot.lane.b32.xlu0 %v1103, 64
        %v1129 = vpop.permute.xlu0 %1128
        %1130 = vrot.lane.b32.xlu0 %v1104, 64
        %v1131 = vpop.permute.xlu0 %1130
        %1132 = vrot.lane.b32.xlu0 %v1105, 64
        %v1133 = vpop.permute.xlu0 %1132
        %1134 = vrot.lane.b32.xlu0 %v1106, 64
        %v1135 = vpop.permute.xlu0 %1134
        %1136 = vrot.lane.b32.xlu0 %v1107, 64
        %v1137 = vpop.permute.xlu0 %1136
        %1138 = vrot.lane.b32.xlu0 %v1108, 64
        %v1139 = vpop.permute.xlu0 %1138
        %1140 = vrot.lane.b32.xlu0 %v1109, 64
        %v1141 = vpop.permute.xlu0 %1140
        %v1174 = vunpack.c.l.b16 %v464
        %v1175 = vunpack.c.l.b16 %v465
        %v1176 = vunpack.c.l.b16 %v466
        %v1177 = vunpack.c.l.b16 %v467
        %v1178 = vunpack.c.l.b16 %v468
        %v1179 = vunpack.c.l.b16 %v469
        %v1180 = vunpack.c.l.b16 %v470
        %v1181 = vunpack.c.l.b16 %v471
        %v1182 = vunpack.c.l.b16 %v472
        %v1183 = vunpack.c.l.b16 %v473
        %v1184 = vunpack.c.l.b16 %v474
        %v1185 = vunpack.c.l.b16 %v475
        %v1186 = vunpack.c.l.b16 %v476
        %v1187 = vunpack.c.l.b16 %v477
        %v1188 = vunpack.c.l.b16 %v478
        %v1189 = vunpack.c.l.b16 %v479
        %v1190 = vunpack.c.l.b16 %v480
        %v1191 = vunpack.c.l.b16 %v481
        %v1192 = vunpack.c.l.b16 %v482
        %v1193 = vunpack.c.l.b16 %v483
        %v1194 = vunpack.c.l.b16 %v484
        %v1195 = vunpack.c.l.b16 %v485
        %v1196 = vunpack.c.l.b16 %v486
        %v1197 = vunpack.c.l.b16 %v487
        %v1198 = vunpack.c.l.b16 %v488
        %v1199 = vunpack.c.l.b16 %v489
        %v1200 = vunpack.c.l.b16 %v490
        %v1201 = vunpack.c.l.b16 %v491
        %v1202 = vunpack.c.l.b16 %v492
        %v1203 = vunpack.c.l.b16 %v493
        %v1204 = vunpack.c.l.b16 %v494
        %v1205 = vunpack.c.l.b16 %v495
        %v1206 = vpack.c.b16 %v1175, %v1174
        %v1207 = vpack.c.b16 %v1177, %v1176
        %v1208 = vpack.c.b16 %v1179, %v1178
        %v1209 = vpack.c.b16 %v1181, %v1180
        %v1210 = vpack.c.b16 %v1183, %v1182
        %v1211 = vpack.c.b16 %v1185, %v1184
        %v1212 = vpack.c.b16 %v1187, %v1186
        %v1213 = vpack.c.b16 %v1189, %v1188
        %v1214 = vpack.c.b16 %v1191, %v1190
        %v1215 = vpack.c.b16 %v1193, %v1192
        %v1216 = vpack.c.b16 %v1195, %v1194
        %v1217 = vpack.c.b16 %v1197, %v1196
        %v1218 = vpack.c.b16 %v1199, %v1198
        %v1219 = vpack.c.b16 %v1201, %v1200
        %v1220 = vpack.c.b16 %v1203, %v1202
        %v1221 = vpack.c.b16 %v1205, %v1204
        %v1254 = vunpack.c.l.b16 %v499
        %v1255 = vunpack.c.l.b16 %v500
        %v1256 = vunpack.c.l.b16 %v501
        %v1257 = vunpack.c.l.b16 %v502
        %v1258 = vunpack.c.l.b16 %v503
        %v1259 = vunpack.c.l.b16 %v504
        %v1260 = vunpack.c.l.b16 %v505
        %v1261 = vunpack.c.l.b16 %v506
        %v1262 = vunpack.c.l.b16 %v507
        %v1263 = vunpack.c.l.b16 %v508
        %v1264 = vunpack.c.l.b16 %v509
        %v1265 = vunpack.c.l.b16 %v510
        %v1266 = vunpack.c.l.b16 %v511
        %v1267 = vunpack.c.l.b16 %v512
        %v1268 = vunpack.c.l.b16 %v513
        %v1269 = vunpack.c.l.b16 %v514
        %v1270 = vunpack.c.l.b16 %v515
        %v1271 = vunpack.c.l.b16 %v516
        %v1272 = vunpack.c.l.b16 %v517
        %v1273 = vunpack.c.l.b16 %v518
        %v1274 = vunpack.c.l.b16 %v519
        %v1275 = vunpack.c.l.b16 %v520
        %v1276 = vunpack.c.l.b16 %v521
        %v1277 = vunpack.c.l.b16 %v522
        %v1278 = vunpack.c.l.b16 %v523
        %v1279 = vunpack.c.l.b16 %v524
        %v1280 = vunpack.c.l.b16 %v525
        %v1281 = vunpack.c.l.b16 %v526
        %v1282 = vunpack.c.l.b16 %v527
        %v1283 = vunpack.c.l.b16 %v528
        %v1284 = vunpack.c.l.b16 %v529
        %v1285 = vunpack.c.l.b16 %v530
        %v1286 = vpack.c.b16 %v1255, %v1254
        %v1287 = vpack.c.b16 %v1257, %v1256
        %v1288 = vpack.c.b16 %v1259, %v1258
        %v1289 = vpack.c.b16 %v1261, %v1260
        %v1290 = vpack.c.b16 %v1263, %v1262
        %v1291 = vpack.c.b16 %v1265, %v1264
        %v1292 = vpack.c.b16 %v1267, %v1266
        %v1293 = vpack.c.b16 %v1269, %v1268
        %v1294 = vpack.c.b16 %v1271, %v1270
        %v1295 = vpack.c.b16 %v1273, %v1272
        %v1296 = vpack.c.b16 %v1275, %v1274
        %v1297 = vpack.c.b16 %v1277, %v1276
        %v1298 = vpack.c.b16 %v1279, %v1278
        %v1299 = vpack.c.b16 %v1281, %v1280
        %v1300 = vpack.c.b16 %v1283, %v1282
        %v1301 = vpack.c.b16 %v1285, %v1284
        %1302 = vrot.lane.b32.xlu0 %v1286, 64
        %v1303 = vpop.permute.xlu0 %1302
        %1304 = vrot.lane.b32.xlu0 %v1287, 64
        %v1305 = vpop.permute.xlu0 %1304
        %1306 = vrot.lane.b32.xlu0 %v1288, 64
        %v1307 = vpop.permute.xlu0 %1306
        %1308 = vrot.lane.b32.xlu0 %v1289, 64
        %v1309 = vpop.permute.xlu0 %1308
        %1310 = vrot.lane.b32.xlu0 %v1290, 64
        %v1311 = vpop.permute.xlu0 %1310
        %1312 = vrot.lane.b32.xlu0 %v1291, 64
        %v1313 = vpop.permute.xlu0 %1312
        %1314 = vrot.lane.b32.xlu0 %v1292, 64
        %v1315 = vpop.permute.xlu0 %1314
        %1316 = vrot.lane.b32.xlu0 %v1293, 64
        %v1317 = vpop.permute.xlu0 %1316
        %1318 = vrot.lane.b32.xlu0 %v1294, 64
        %v1319 = vpop.permute.xlu0 %1318
        %1320 = vrot.lane.b32.xlu0 %v1295, 64
        %v1321 = vpop.permute.xlu0 %1320
        %1322 = vrot.lane.b32.xlu0 %v1296, 64
        %v1323 = vpop.permute.xlu0 %1322
        %1324 = vrot.lane.b32.xlu0 %v1297, 64
        %v1325 = vpop.permute.xlu0 %1324
        %1326 = vrot.lane.b32.xlu0 %v1298, 64
        %v1327 = vpop.permute.xlu0 %1326
        %1328 = vrot.lane.b32.xlu0 %v1299, 64
        %v1329 = vpop.permute.xlu0 %1328
        %1330 = vrot.lane.b32.xlu0 %v1300, 64
        %v1331 = vpop.permute.xlu0 %1330
        %1332 = vrot.lane.b32.xlu0 %v1301, 64
        %v1333 = vpop.permute.xlu0 %1332
        %v1366 = vunpack.c.l.b16 %v534
        %v1367 = vunpack.c.l.b16 %v535
        %v1368 = vunpack.c.l.b16 %v536
        %v1369 = vunpack.c.l.b16 %v537
        %v1370 = vunpack.c.l.b16 %v538
        %v1371 = vunpack.c.l.b16 %v539
        %v1372 = vunpack.c.l.b16 %v540
        %v1373 = vunpack.c.l.b16 %v541
        %v1374 = vunpack.c.l.b16 %v542
        %v1375 = vunpack.c.l.b16 %v543
        %v1376 = vunpack.c.l.b16 %v544
        %v1377 = vunpack.c.l.b16 %v545
        %v1378 = vunpack.c.l.b16 %v546
        %v1379 = vunpack.c.l.b16 %v547
        %v1380 = vunpack.c.l.b16 %v548
        %v1381 = vunpack.c.l.b16 %v549
        %v1382 = vunpack.c.l.b16 %v550
        %v1383 = vunpack.c.l.b16 %v551
        %v1384 = vunpack.c.l.b16 %v552
        %v1385 = vunpack.c.l.b16 %v553
        %v1386 = vunpack.c.l.b16 %v554
        %v1387 = vunpack.c.l.b16 %v555
        %v1388 = vunpack.c.l.b16 %v556
        %v1389 = vunpack.c.l.b16 %v557
        %v1390 = vunpack.c.l.b16 %v558
        %v1391 = vunpack.c.l.b16 %v559
        %v1392 = vunpack.c.l.b16 %v560
        %v1393 = vunpack.c.l.b16 %v561
        %v1394 = vunpack.c.l.b16 %v562
        %v1395 = vunpack.c.l.b16 %v563
        %v1396 = vunpack.c.l.b16 %v564
        %v1397 = vunpack.c.l.b16 %v565
        %v1398 = vpack.c.b16 %v1367, %v1366
        %v1399 = vpack.c.b16 %v1369, %v1368
        %v1400 = vpack.c.b16 %v1371, %v1370
        %v1401 = vpack.c.b16 %v1373, %v1372
        %v1402 = vpack.c.b16 %v1375, %v1374
        %v1403 = vpack.c.b16 %v1377, %v1376
        %v1404 = vpack.c.b16 %v1379, %v1378
        %v1405 = vpack.c.b16 %v1381, %v1380
        %v1406 = vpack.c.b16 %v1383, %v1382
        %v1407 = vpack.c.b16 %v1385, %v1384
        %v1408 = vpack.c.b16 %v1387, %v1386
        %v1409 = vpack.c.b16 %v1389, %v1388
        %v1410 = vpack.c.b16 %v1391, %v1390
        %v1411 = vpack.c.b16 %v1393, %v1392
        %v1412 = vpack.c.b16 %v1395, %v1394
        %v1413 = vpack.c.b16 %v1397, %v1396
        %vm1414 = vcmask 523264
        %v1417 = vsel %vm1414, %v630, %v727
        %v1421 = vsel %vm1414, %v631, %v729
        %v1425 = vsel %vm1414, %v632, %v731
        %v1429 = vsel %vm1414, %v633, %v733
        %v1433 = vsel %vm1414, %v634, %v735
        %v1437 = vsel %vm1414, %v635, %v737
        %v1441 = vsel %vm1414, %v636, %v739
        %v1445 = vsel %vm1414, %v637, %v741
        %v1449 = vsel %vm1414, %v638, %v743
        %v1453 = vsel %vm1414, %v639, %v745
        %v1457 = vsel %vm1414, %v640, %v747
        %v1461 = vsel %vm1414, %v641, %v749
        %v1465 = vsel %vm1414, %v642, %v751
        %v1469 = vsel %vm1414, %v643, %v753
        %v1473 = vsel %vm1414, %v644, %v755
        %v1477 = vsel %vm1414, %v645, %v757
        %v1481 = vsel %vm1414, %v822, %v919
        %v1485 = vsel %vm1414, %v823, %v921
        %v1489 = vsel %vm1414, %v824, %v923
        %v1493 = vsel %vm1414, %v825, %v925
        %v1497 = vsel %vm1414, %v826, %v927
        %v1501 = vsel %vm1414, %v827, %v929
        %v1505 = vsel %vm1414, %v828, %v931
        %v1509 = vsel %vm1414, %v829, %v933
        %v1513 = vsel %vm1414, %v830, %v935
        %v1517 = vsel %vm1414, %v831, %v937
        %v1521 = vsel %vm1414, %v832, %v939
        %v1525 = vsel %vm1414, %v833, %v941
        %v1529 = vsel %vm1414, %v834, %v943
        %v1533 = vsel %vm1414, %v835, %v945
        %v1537 = vsel %vm1414, %v836, %v947
        %v1541 = vsel %vm1414, %v837, %v949
        %v1545 = vsel %vm1414, %v1014, %v1111
        %v1549 = vsel %vm1414, %v1015, %v1113
        %v1553 = vsel %vm1414, %v1016, %v1115
        %v1557 = vsel %vm1414, %v1017, %v1117
        %v1561 = vsel %vm1414, %v1018, %v1119
        %v1565 = vsel %vm1414, %v1019, %v1121
        %v1569 = vsel %vm1414, %v1020, %v1123
        %v1573 = vsel %vm1414, %v1021, %v1125
        %v1577 = vsel %vm1414, %v1022, %v1127
        %v1581 = vsel %vm1414, %v1023, %v1129
        %v1585 = vsel %vm1414, %v1024, %v1131
        %v1589 = vsel %vm1414, %v1025, %v1133
        %v1593 = vsel %vm1414, %v1026, %v1135
        %v1597 = vsel %vm1414, %v1027, %v1137
        %v1601 = vsel %vm1414, %v1028, %v1139
        %v1605 = vsel %vm1414, %v1029, %v1141
        %v1609 = vsel %vm1414, %v1206, %v1303
        %v1613 = vsel %vm1414, %v1207, %v1305
        %v1617 = vsel %vm1414, %v1208, %v1307
        %v1621 = vsel %vm1414, %v1209, %v1309
        %v1625 = vsel %vm1414, %v1210, %v1311
        %v1629 = vsel %vm1414, %v1211, %v1313
        %v1633 = vsel %vm1414, %v1212, %v1315
        %v1637 = vsel %vm1414, %v1213, %v1317
        %v1641 = vsel %vm1414, %v1214, %v1319
        %v1645 = vsel %vm1414, %v1215, %v1321
        %v1649 = vsel %vm1414, %v1216, %v1323
        %v1653 = vsel %vm1414, %v1217, %v1325
        %v1657 = vsel %vm1414, %v1218, %v1327
        %v1661 = vsel %vm1414, %v1219, %v1329
        %v1665 = vsel %vm1414, %v1220, %v1331
        %v1669 = vsel %vm1414, %v1221, %v1333
        %v1671 = vld [vmem:[#allocation6] sm:$0xff]
        %v1672 = vld [vmem:[#allocation6 + $0x8] sm:$0xff]
        %v1673 = vld [vmem:[#allocation6 + $0x10] sm:$0xff]
        %v1674 = vld [vmem:[#allocation6 + $0x18] sm:$0xff]
        %v1675 = vld [vmem:[#allocation6 + $0x20] sm:$0xff]
        %v1676 = vld [vmem:[#allocation6 + $0x28] sm:$0xff]
        %v1677 = vld [vmem:[#allocation6 + $0x30] sm:$0xff]
        %v1678 = vld [vmem:[#allocation6 + $0x38] sm:$0xff]
        %v1679 = vld [vmem:[#allocation6 + $0x40] sm:$0xff]
        %v1680 = vld [vmem:[#allocation6 + $0x48] sm:$0xff]
        %v1681 = vld [vmem:[#allocation6 + $0x50] sm:$0xff]
        %v1682 = vld [vmem:[#allocation6 + $0x58] sm:$0xff]
        %v1683 = vld [vmem:[#allocation6 + $0x60] sm:$0xff]
        %v1684 = vld [vmem:[#allocation6 + $0x68] sm:$0xff]
        %v1685 = vld [vmem:[#allocation6 + $0x70] sm:$0xff]
        %v1686 = vld [vmem:[#allocation6 + $0x78] sm:$0xff]
        %v1687 = vld [vmem:[#allocation6 + $0x80] sm:$0xff]
        %v1688 = vld [vmem:[#allocation6 + $0x88] sm:$0xff]
        %v1689 = vld [vmem:[#allocation6 + $0x90] sm:$0xff]
        %v1690 = vld [vmem:[#allocation6 + $0x98] sm:$0xff]
        %v1691 = vld [vmem:[#allocation6 + $0xa0] sm:$0xff]
        %v1692 = vld [vmem:[#allocation6 + $0xa8] sm:$0xff]
        %v1693 = vld [vmem:[#allocation6 + $0xb0] sm:$0xff]
        %v1694 = vld [vmem:[#allocation6 + $0xb8] sm:$0xff]
        %v1695 = vld [vmem:[#allocation6 + $0xc0] sm:$0xff]
        %v1696 = vld [vmem:[#allocation6 + $0xc8] sm:$0xff]
        %v1697 = vld [vmem:[#allocation6 + $0xd0] sm:$0xff]
        %v1698 = vld [vmem:[#allocation6 + $0xd8] sm:$0xff]
        %v1699 = vld [vmem:[#allocation6 + $0xe0] sm:$0xff]
        %v1700 = vld [vmem:[#allocation6 + $0xe8] sm:$0xff]
        %v1701 = vld [vmem:[#allocation6 + $0xf0] sm:$0xff]
        %v1702 = vld [vmem:[#allocation6 + $0xf8] sm:$0xff]
        %v1703 = vld [vmem:[#allocation6 + $0x100] sm:$0xff]
        %v1704 = vld [vmem:[#allocation6 + $0x108] sm:$0xff]
        %v1705 = vld [vmem:[#allocation6 + $0x110] sm:$0xff]
        %v1706 = vld [vmem:[#allocation6 + $0x118] sm:$0xff]
        %v1707 = vld [vmem:[#allocation6 + $0x120] sm:$0xff]
        %v1708 = vld [vmem:[#allocation6 + $0x128] sm:$0xff]
        %v1709 = vld [vmem:[#allocation6 + $0x130] sm:$0xff]
        %v1710 = vld [vmem:[#allocation6 + $0x138] sm:$0xff]
        %v1711 = vld [vmem:[#allocation6 + $0x140] sm:$0xff]
        %v1712 = vld [vmem:[#allocation6 + $0x148] sm:$0xff]
        %v1713 = vld [vmem:[#allocation6 + $0x150] sm:$0xff]
        %v1714 = vld [vmem:[#allocation6 + $0x158] sm:$0xff]
        %v1715 = vld [vmem:[#allocation6 + $0x160] sm:$0xff]
        %v1716 = vld [vmem:[#allocation6 + $0x168] sm:$0xff]
        %v1717 = vld [vmem:[#allocation6 + $0x170] sm:$0xff]
        %v1718 = vld [vmem:[#allocation6 + $0x178] sm:$0xff]
        %v1719 = vld [vmem:[#allocation6 + $0x180] sm:$0xff]
        %v1720 = vld [vmem:[#allocation6 + $0x188] sm:$0xff]
        %v1721 = vld [vmem:[#allocation6 + $0x190] sm:$0xff]
        %v1722 = vld [vmem:[#allocation6 + $0x198] sm:$0xff]
        %v1723 = vld [vmem:[#allocation6 + $0x1a0] sm:$0xff]
        %v1724 = vld [vmem:[#allocation6 + $0x1a8] sm:$0xff]
        %v1725 = vld [vmem:[#allocation6 + $0x1b0] sm:$0xff]
        %v1726 = vld [vmem:[#allocation6 + $0x1b8] sm:$0xff]
        %v1727 = vld [vmem:[#allocation6 + $0x1c0] sm:$0xff]
        %v1728 = vld [vmem:[#allocation6 + $0x1c8] sm:$0xff]
        %v1729 = vld [vmem:[#allocation6 + $0x1d0] sm:$0xff]
        %v1730 = vld [vmem:[#allocation6 + $0x1d8] sm:$0xff]
        %v1731 = vld [vmem:[#allocation6 + $0x1e0] sm:$0xff]
        %v1732 = vld [vmem:[#allocation6 + $0x1e8] sm:$0xff]
        %v1733 = vld [vmem:[#allocation6 + $0x1f0] sm:$0xff]
        %v1734 = vld [vmem:[#allocation6 + $0x1f8] sm:$0xff]
        %v1735 = vld [vmem:[#allocation6 + $0x200] sm:$0xff]
        %v1736 = vld [vmem:[#allocation6 + $0x208] sm:$0xff]
        %v1737 = vld [vmem:[#allocation6 + $0x210] sm:$0xff]
        %v1738 = vld [vmem:[#allocation6 + $0x218] sm:$0xff]
        %v1739 = vld [vmem:[#allocation6 + $0x220] sm:$0xff]
        %v1740 = vld [vmem:[#allocation6 + $0x228] sm:$0xff]
        %v1741 = vld [vmem:[#allocation6 + $0x230] sm:$0xff]
        %v1742 = vld [vmem:[#allocation6 + $0x238] sm:$0xff]
        %v1743 = vld [vmem:[%s2] sm:$0x3]
        %v1745 = vlaneseq
        %v1746 = vshrl.u32 %v1745, 7
        %v1747 = vsub.s32 0, %v1746
        %v1748 = vrot.slane %v1743, %v1747
        %v1749 = vlaneseq
        %v1750 = vshrl.u32 %v1749, 7
        %v1751 = vsub.s32 1, %v1750
        %v1752 = vrot.slane %v1743, %v1751
        %v1827 = vunpack.c.l.b16 %v1671
        %v1828 = vunpack.c.h.b16 %v1671
        %v1829 = vunpack.c.l.b16 %v1672
        %v1830 = vunpack.c.h.b16 %v1672
        %v1831 = vunpack.c.l.b16 %v1673
        %v1832 = vunpack.c.h.b16 %v1673
        %v1833 = vunpack.c.l.b16 %v1674
        %v1834 = vunpack.c.h.b16 %v1674
        %v1835 = vunpack.c.l.b16 %v1675
        %v1836 = vunpack.c.h.b16 %v1675
        %v1837 = vunpack.c.l.b16 %v1676
        %v1838 = vunpack.c.h.b16 %v1676
        %v1839 = vunpack.c.l.b16 %v1677
        %v1840 = vunpack.c.h.b16 %v1677
        %v1841 = vunpack.c.l.b16 %v1678
        %v1842 = vunpack.c.h.b16 %v1678
        %v1843 = vunpack.c.l.b16 %v1679
        %v1844 = vunpack.c.h.b16 %v1679
        %v1845 = vunpack.c.l.b16 %v1680
        %v1846 = vunpack.c.h.b16 %v1680
        %v1847 = vunpack.c.l.b16 %v1681
        %v1848 = vunpack.c.h.b16 %v1681
        %v1849 = vunpack.c.l.b16 %v1682
        %v1850 = vunpack.c.h.b16 %v1682
        %v1851 = vunpack.c.l.b16 %v1683
        %v1852 = vunpack.c.h.b16 %v1683
        %v1853 = vunpack.c.l.b16 %v1684
        %v1854 = vunpack.c.h.b16 %v1684
        %v1855 = vunpack.c.l.b16 %v1685
        %v1856 = vunpack.c.h.b16 %v1685
        %v1857 = vunpack.c.l.b16 %v1686
        %v1858 = vunpack.c.h.b16 %v1686
        %v1859 = vunpack.c.l.b16 %v1687
        %v1860 = vunpack.c.h.b16 %v1687
        %v1861 = vunpack.c.l.b16 %v1688
        %v1862 = vunpack.c.h.b16 %v1688
        %v1863 = vunpack.c.l.b16 %v1689
        %v1864 = vunpack.c.h.b16 %v1689
        %v1865 = vunpack.c.l.b16 %v1690
        %v1866 = vunpack.c.h.b16 %v1690
        %v1867 = vunpack.c.l.b16 %v1691
        %v1868 = vunpack.c.h.b16 %v1691
        %v1869 = vunpack.c.l.b16 %v1692
        %v1870 = vunpack.c.h.b16 %v1692
        %v1871 = vunpack.c.l.b16 %v1693
        %v1872 = vunpack.c.h.b16 %v1693
        %v1873 = vunpack.c.l.b16 %v1694
        %v1874 = vunpack.c.h.b16 %v1694
        %v1875 = vunpack.c.l.b16 %v1695
        %v1876 = vunpack.c.h.b16 %v1695
        %v1877 = vunpack.c.l.b16 %v1696
        %v1878 = vunpack.c.h.b16 %v1696
        %v1879 = vunpack.c.l.b16 %v1697
        %v1880 = vunpack.c.h.b16 %v1697
        %v1881 = vunpack.c.l.b16 %v1698
        %v1882 = vunpack.c.h.b16 %v1698
        %v1883 = vunpack.c.l.b16 %v1699
        %v1884 = vunpack.c.h.b16 %v1699
        %v1885 = vunpack.c.l.b16 %v1700
        %v1886 = vunpack.c.h.b16 %v1700
        %v1887 = vunpack.c.l.b16 %v1701
        %v1888 = vunpack.c.h.b16 %v1701
        %v1889 = vunpack.c.l.b16 %v1702
        %v1890 = vunpack.c.h.b16 %v1702
        %v1891 = vunpack.c.l.b16 %v1703
        %v1892 = vunpack.c.h.b16 %v1703
        %v1893 = vunpack.c.l.b16 %v1704
        %v1894 = vunpack.c.h.b16 %v1704
        %v1895 = vunpack.c.l.b16 %v1705
        %v1896 = vunpack.c.h.b16 %v1705
        %v1897 = vunpack.c.l.b16 %v1706
        %v1898 = vunpack.c.h.b16 %v1706
        %v1899 = vunpack.c.l.b16 %v1707
        %v1900 = vunpack.c.h.b16 %v1707
        %v1901 = vunpack.c.l.b16 %v1708
        %v1902 = vunpack.c.h.b16 %v1708
        %v1903 = vunpack.c.l.b16 %v1709
        %v1904 = vunpack.c.h.b16 %v1709
        %v1905 = vunpack.c.l.b16 %v1710
        %v1906 = vunpack.c.h.b16 %v1710
        %v1907 = vunpack.c.l.b16 %v1711
        %v1908 = vunpack.c.h.b16 %v1711
        %v1909 = vunpack.c.l.b16 %v1712
        %v1910 = vunpack.c.h.b16 %v1712
        %v1911 = vunpack.c.l.b16 %v1713
        %v1912 = vunpack.c.h.b16 %v1713
        %v1913 = vunpack.c.l.b16 %v1714
        %v1914 = vunpack.c.h.b16 %v1714
        %v1915 = vunpack.c.l.b16 %v1715
        %v1916 = vunpack.c.h.b16 %v1715
        %v1917 = vunpack.c.l.b16 %v1716
        %v1918 = vunpack.c.h.b16 %v1716
        %v1919 = vunpack.c.l.b16 %v1717
        %v1920 = vunpack.c.h.b16 %v1717
        %v1921 = vunpack.c.l.b16 %v1718
        %v1922 = vunpack.c.h.b16 %v1718
        %v1923 = vunpack.c.l.b16 %v1719
        %v1924 = vunpack.c.h.b16 %v1719
        %v1925 = vunpack.c.l.b16 %v1720
        %v1926 = vunpack.c.h.b16 %v1720
        %v1927 = vunpack.c.l.b16 %v1721
        %v1928 = vunpack.c.h.b16 %v1721
        %v1929 = vunpack.c.l.b16 %v1722
        %v1930 = vunpack.c.h.b16 %v1722
        %v1931 = vunpack.c.l.b16 %v1723
        %v1932 = vunpack.c.h.b16 %v1723
        %v1933 = vunpack.c.l.b16 %v1724
        %v1934 = vunpack.c.h.b16 %v1724
        %v1935 = vunpack.c.l.b16 %v1725
        %v1936 = vunpack.c.h.b16 %v1725
        %v1937 = vunpack.c.l.b16 %v1726
        %v1938 = vunpack.c.h.b16 %v1726
        %v1939 = vunpack.c.l.b16 %v1727
        %v1940 = vunpack.c.h.b16 %v1727
        %v1941 = vunpack.c.l.b16 %v1728
        %v1942 = vunpack.c.h.b16 %v1728
        %v1943 = vunpack.c.l.b16 %v1729
        %v1944 = vunpack.c.h.b16 %v1729
        %v1945 = vunpack.c.l.b16 %v1730
        %v1946 = vunpack.c.h.b16 %v1730
        %v1947 = vunpack.c.l.b16 %v1731
        %v1948 = vunpack.c.h.b16 %v1731
        %v1949 = vunpack.c.l.b16 %v1732
        %v1950 = vunpack.c.h.b16 %v1732
        %v1951 = vunpack.c.l.b16 %v1733
        %v1952 = vunpack.c.h.b16 %v1733
        %v1953 = vunpack.c.l.b16 %v1734
        %v1954 = vunpack.c.h.b16 %v1734
        %v1955 = vunpack.c.l.b16 %v1735
        %v1956 = vunpack.c.h.b16 %v1735
        %v1957 = vunpack.c.l.b16 %v1736
        %v1958 = vunpack.c.h.b16 %v1736
        %v1959 = vunpack.c.l.b16 %v1737
        %v1960 = vunpack.c.h.b16 %v1737
        %v1961 = vunpack.c.l.b16 %v1738
        %v1962 = vunpack.c.h.b16 %v1738
        %v1963 = vunpack.c.l.b16 %v1739
        %v1964 = vunpack.c.h.b16 %v1739
        %v1965 = vunpack.c.l.b16 %v1740
        %v1966 = vunpack.c.h.b16 %v1740
        %v1967 = vunpack.c.l.b16 %v1741
        %v1968 = vunpack.c.h.b16 %v1741
        %v1969 = vunpack.c.l.b16 %v1742
        %v1970 = vunpack.c.h.b16 %v1742
        %v1971 = vpack.c.b16 %v1829, %v1827
        %v1972 = vpack.c.b16 %v1830, %v1828
        %v1973 = vpack.c.b16 %v1833, %v1831
        %v1974 = vpack.c.b16 %v1834, %v1832
        %v1975 = vpack.c.b16 %v1837, %v1835
        %v1976 = vpack.c.b16 %v1838, %v1836
        %v1977 = vpack.c.b16 %v1841, %v1839
        %v1978 = vpack.c.b16 %v1842, %v1840
        %v1979 = vpack.c.b16 %v1845, %v1843
        %v1980 = vpack.c.b16 %v1846, %v1844
        %v1981 = vpack.c.b16 %v1849, %v1847
        %v1982 = vpack.c.b16 %v1850, %v1848
        %v1983 = vpack.c.b16 %v1853, %v1851
        %v1984 = vpack.c.b16 %v1854, %v1852
        %v1985 = vpack.c.b16 %v1857, %v1855
        %v1986 = vpack.c.b16 %v1858, %v1856
        %v1987 = vpack.c.b16 %v1861, %v1859
        %v1988 = vpack.c.b16 %v1862, %v1860
        %v1989 = vpack.c.b16 %v1865, %v1863
        %v1990 = vpack.c.b16 %v1866, %v1864
        %v1991 = vpack.c.b16 %v1869, %v1867
        %v1992 = vpack.c.b16 %v1870, %v1868
        %v1993 = vpack.c.b16 %v1873, %v1871
        %v1994 = vpack.c.b16 %v1874, %v1872
        %v1995 = vpack.c.b16 %v1877, %v1875
        %v1996 = vpack.c.b16 %v1878, %v1876
        %v1997 = vpack.c.b16 %v1881, %v1879
        %v1998 = vpack.c.b16 %v1882, %v1880
        %v1999 = vpack.c.b16 %v1885, %v1883
        %v2000 = vpack.c.b16 %v1886, %v1884
        %v2001 = vpack.c.b16 %v1889, %v1887
        %v2002 = vpack.c.b16 %v1890, %v1888
        %v2003 = vpack.c.b16 %v1893, %v1891
        %v2004 = vpack.c.b16 %v1894, %v1892
        %v2005 = vpack.c.b16 %v1897, %v1895
        %v2006 = vpack.c.b16 %v1898, %v1896
        %v2007 = vpack.c.b16 %v1901, %v1899
        %v2008 = vpack.c.b16 %v1902, %v1900
        %v2009 = vpack.c.b16 %v1905, %v1903
        %v2010 = vpack.c.b16 %v1906, %v1904
        %v2011 = vpack.c.b16 %v1909, %v1907
        %v2012 = vpack.c.b16 %v1910, %v1908
        %v2013 = vpack.c.b16 %v1913, %v1911
        %v2014 = vpack.c.b16 %v1914, %v1912
        %v2015 = vpack.c.b16 %v1917, %v1915
        %v2016 = vpack.c.b16 %v1918, %v1916
        %v2017 = vpack.c.b16 %v1921, %v1919
        %v2018 = vpack.c.b16 %v1922, %v1920
        %v2019 = vpack.c.b16 %v1925, %v1923
        %v2020 = vpack.c.b16 %v1926, %v1924
        %v2021 = vpack.c.b16 %v1929, %v1927
        %v2022 = vpack.c.b16 %v1930, %v1928
        %v2023 = vpack.c.b16 %v1933, %v1931
        %v2024 = vpack.c.b16 %v1934, %v1932
        %v2025 = vpack.c.b16 %v1937, %v1935
        %v2026 = vpack.c.b16 %v1938, %v1936
        %v2027 = vpack.c.b16 %v1941, %v1939
        %v2028 = vpack.c.b16 %v1942, %v1940
        %v2029 = vpack.c.b16 %v1945, %v1943
        %v2030 = vpack.c.b16 %v1946, %v1944
        %v2031 = vpack.c.b16 %v1949, %v1947
        %v2032 = vpack.c.b16 %v1950, %v1948
        %v2033 = vpack.c.b16 %v1953, %v1951
        %v2034 = vpack.c.b16 %v1954, %v1952
        %v2035 = vpack.c.b16 %v1957, %v1955
        %v2036 = vpack.c.b16 %v1958, %v1956
        %v2037 = vpack.c.b16 %v1961, %v1959
        %v2038 = vpack.c.b16 %v1962, %v1960
        %v2039 = vpack.c.b16 %v1965, %v1963
        %v2040 = vpack.c.b16 %v1966, %v1964
        %v2041 = vpack.c.b16 %v1969, %v1967
        %v2042 = vpack.c.b16 %v1970, %v1968
        %v2116 = vsel %vm1414, %v1398, 0
        %v2119 = vsel %vm1414, %v1399, 0
        %v2122 = vsel %vm1414, %v1400, 0
        %v2125 = vsel %vm1414, %v1401, 0
        %v2128 = vsel %vm1414, %v1402, 0
        %v2131 = vsel %vm1414, %v1403, 0
        %v2134 = vsel %vm1414, %v1404, 0
        %v2137 = vsel %vm1414, %v1405, 0
        %v2140 = vsel %vm1414, %v1406, 0
        %v2143 = vsel %vm1414, %v1407, 0
        %v2146 = vsel %vm1414, %v1408, 0
        %v2149 = vsel %vm1414, %v1409, 0
        %v2152 = vsel %vm1414, %v1410, 0
        %v2155 = vsel %vm1414, %v1411, 0
        %v2158 = vsel %vm1414, %v1412, 0
        %v2161 = vsel %vm1414, %v1413, 0
        %2163 = vmatprep.subr.bf16.mxu0 %v1972
        %2164 = vmatpush1.bf16.msra.mxu0 %v1971
        %2165 = vmatprep.subr.bf16.mxu0 %v1974
        %2166 = vmatpush1.bf16.msra.mxu0 %v1973
        %2167 = vmatprep.subr.bf16.mxu0 %v1976
        %2168 = vmatpush1.bf16.msra.mxu0 %v1975
        %2169 = vmatprep.subr.bf16.mxu0 %v1978
        %2170 = vmatpush1.bf16.msra.mxu0 %v1977
        %2171 = vmatprep.subr.bf16.mxu0 %v1980
        %2172 = vmatpush1.bf16.msra.mxu0 %v1979
        %2173 = vmatprep.subr.bf16.mxu0 %v1982
        %2174 = vmatpush1.bf16.msra.mxu0 %v1981
        %2175 = vmatprep.subr.bf16.mxu0 %v1984
        %2176 = vmatpush1.bf16.msra.mxu0 %v1983
        %2177 = vmatprep.subr.bf16.mxu0 %v1986
        %2178 = vmatpush1.bf16.msra.mxu0 %v1985
        %2179 = vmatprep.subr.bf16.mxu0 %v1988
        %2180 = vmatpush1.bf16.msra.mxu0 %v1987
        %2181 = vmatprep.subr.bf16.mxu0 %v1990
        %2182 = vmatpush1.bf16.msra.mxu0 %v1989
        %2183 = vmatprep.subr.bf16.mxu0 %v1992
        %2184 = vmatpush1.bf16.msra.mxu0 %v1991
        %2185 = vmatprep.subr.bf16.mxu0 %v1994
        %2186 = vmatpush1.bf16.msra.mxu0 %v1993
        %2187 = vmatprep.subr.bf16.mxu0 %v1996
        %2188 = vmatpush1.bf16.msra.mxu0 %v1995
        %2189 = vmatprep.subr.bf16.mxu0 %v1998
        %2190 = vmatpush1.bf16.msra.mxu0 %v1997
        %2191 = vmatprep.subr.bf16.mxu0 %v2000
        %2192 = vmatpush1.bf16.msra.mxu0 %v1999
        %2193 = vmatprep.subr.bf16.mxu0 %v2002
        %2194 = vmatpush1.bf16.msra.mxu0 %v2001
        %2195 = vmatprep.mubr.bf16.mxu0 %v1481
        %2196 = vmatmul.mubr.bf16.gmra.mrb[0].mxu0 %v1417
        %v2197 = vpop.f32.mrb[0].mxu0
        %v2198 = vadd.f32 %v1748, %v2197
        %v2199 = vpop.f32.mrb[0].mxu0
        %v2200 = vadd.f32 %v1752, %v2199
        %v2201 = vpop.f32.mrb[0].mxu0
        %v2202 = vadd.f32 %v1748, %v2201
        %v2203 = vpop.f32.mrb[0].mxu0
        %v2204 = vadd.f32 %v1752, %v2203
        %2205 = vmatprep.mubr.bf16.mxu0 %v1485
        %2206 = vmatmul.mubr.bf16.gmra.mrb[0].mxu0 %v1421
        %v2207 = vpop.f32.mrb[0].mxu0
        %v2208 = vadd.f32 %v1748, %v2207
        %v2209 = vpop.f32.mrb[0].mxu0
        %v2210 = vadd.f32 %v1752, %v2209
        %v2211 = vpop.f32.mrb[0].mxu0
        %v2212 = vadd.f32 %v1748, %v2211
        %v2213 = vpop.f32.mrb[0].mxu0
        %v2214 = vadd.f32 %v1752, %v2213
        %2215 = vmatprep.mubr.bf16.mxu0 %v1489
        %2216 = vmatmul.mubr.bf16.gmra.mrb[0].mxu0 %v1425
        %v2217 = vpop.f32.mrb[0].mxu0
        %v2218 = vadd.f32 %v1748, %v2217
        %v2219 = vpop.f32.mrb[0].mxu0
        %v2220 = vadd.f32 %v1752, %v2219
        %v2221 = vpop.f32.mrb[0].mxu0
        %v2222 = vadd.f32 %v1748, %v2221
        %v2223 = vpop.f32.mrb[0].mxu0
        %v2224 = vadd.f32 %v1752, %v2223
        %2225 = vmatprep.mubr.bf16.mxu0 %v1493
        %2226 = vmatmul.mubr.bf16.gmra.mrb[0].mxu0 %v1429
        %v2227 = vpop.f32.mrb[0].mxu0
        %v2228 = vadd.f32 %v1748, %v2227
        %v2229 = vpop.f32.mrb[0].mxu0
        %v2230 = vadd.f32 %v1752, %v2229
        %v2231 = vpop.f32.mrb[0].mxu0
        %v2232 = vadd.f32 %v1748, %v2231
        %v2233 = vpop.f32.mrb[0].mxu0
        %v2234 = vadd.f32 %v1752, %v2233
        %2235 = vmatprep.mubr.bf16.mxu0 %v1497
        %2236 = vmatmul.mubr.bf16.gmra.mrb[0].mxu0 %v1433
        %v2237 = vpop.f32.mrb[0].mxu0
        %v2238 = vadd.f32 %v1748, %v2237
        %v2239 = vpop.f32.mrb[0].mxu0
        %v2240 = vadd.f32 %v1752, %v2239
        %v2241 = vpop.f32.mrb[0].mxu0
        %v2242 = vadd.f32 %v1748, %v2241
        %v2243 = vpop.f32.mrb[0].mxu0
        %v2244 = vadd.f32 %v1752, %v2243
        %2245 = vmatprep.mubr.bf16.mxu0 %v1501
        %2246 = vmatmul.mubr.bf16.gmra.mrb[0].mxu0 %v1437
        %v2247 = vpop.f32.mrb[0].mxu0
        %v2248 = vadd.f32 %v1748, %v2247
        %v2249 = vpop.f32.mrb[0].mxu0
        %v2250 = vadd.f32 %v1752, %v2249
        %v2251 = vpop.f32.mrb[0].mxu0
        %v2252 = vadd.f32 %v1748, %v2251
        %v2253 = vpop.f32.mrb[0].mxu0
        %v2254 = vadd.f32 %v1752, %v2253
        %2255 = vmatprep.mubr.bf16.mxu0 %v1505
        %2256 = vmatmul.mubr.bf16.gmra.mrb[0].mxu0 %v1441
        %v2257 = vpop.f32.mrb[0].mxu0
        %v2258 = vadd.f32 %v1748, %v2257
        %v2259 = vpop.f32.mrb[0].mxu0
        %v2260 = vadd.f32 %v1752, %v2259
        %v2261 = vpop.f32.mrb[0].mxu0
        %v2262 = vadd.f32 %v1748, %v2261
        %v2263 = vpop.f32.mrb[0].mxu0
        %v2264 = vadd.f32 %v1752, %v2263
        %2265 = vmatprep.mubr.bf16.mxu0 %v1509
        %2266 = vmatmul.mubr.bf16.gmra.mrb[0].mxu0 %v1445
        %v2267 = vpop.f32.mrb[0].mxu0
        %v2268 = vadd.f32 %v1748, %v2267
        %v2269 = vpop.f32.mrb[0].mxu0
        %v2270 = vadd.f32 %v1752, %v2269
        %v2271 = vpop.f32.mrb[0].mxu0
        %v2272 = vadd.f32 %v1748, %v2271
        %v2273 = vpop.f32.mrb[0].mxu0
        %v2274 = vadd.f32 %v1752, %v2273
        %2275 = vmatprep.mubr.bf16.mxu0 %v1513
        %2276 = vmatmul.mubr.bf16.gmra.mrb[0].mxu0 %v1449
        %v2277 = vpop.f32.mrb[0].mxu0
        %v2278 = vadd.f32 %v1748, %v2277
        %v2279 = vpop.f32.mrb[0].mxu0
        %v2280 = vadd.f32 %v1752, %v2279
        %v2281 = vpop.f32.mrb[0].mxu0
        %v2282 = vadd.f32 %v1748, %v2281
        %v2283 = vpop.f32.mrb[0].mxu0
        %v2284 = vadd.f32 %v1752, %v2283
        %2285 = vmatprep.mubr.bf16.mxu0 %v1517
        %2286 = vmatmul.mubr.bf16.gmra.mrb[0].mxu0 %v1453
        %v2287 = vpop.f32.mrb[0].mxu0
        %v2288 = vadd.f32 %v1748, %v2287
        %v2289 = vpop.f32.mrb[0].mxu0
        %v2290 = vadd.f32 %v1752, %v2289
        %v2291 = vpop.f32.mrb[0].mxu0
        %v2292 = vadd.f32 %v1748, %v2291
        %v2293 = vpop.f32.mrb[0].mxu0
        %v2294 = vadd.f32 %v1752, %v2293
        %2295 = vmatprep.mubr.bf16.mxu0 %v1521
        %2296 = vmatmul.mubr.bf16.gmra.mrb[0].mxu0 %v1457
        %v2297 = vpop.f32.mrb[0].mxu0
        %v2298 = vadd.f32 %v1748, %v2297
        %v2299 = vpop.f32.mrb[0].mxu0
        %v2300 = vadd.f32 %v1752, %v2299
        %v2301 = vpop.f32.mrb[0].mxu0
        %v2302 = vadd.f32 %v1748, %v2301
        %v2303 = vpop.f32.mrb[0].mxu0
        %v2304 = vadd.f32 %v1752, %v2303
        %2305 = vmatprep.mubr.bf16.mxu0 %v1525
        %2306 = vmatmul.mubr.bf16.gmra.mrb[0].mxu0 %v1461
        %v2307 = vpop.f32.mrb[0].mxu0
        %v2308 = vadd.f32 %v1748, %v2307
        %v2309 = vpop.f32.mrb[0].mxu0
        %v2310 = vadd.f32 %v1752, %v2309
        %v2311 = vpop.f32.mrb[0].mxu0
        %v2312 = vadd.f32 %v1748, %v2311
        %v2313 = vpop.f32.mrb[0].mxu0
        %v2314 = vadd.f32 %v1752, %v2313
        %2315 = vmatprep.mubr.bf16.mxu0 %v1529
        %2316 = vmatmul.mubr.bf16.gmra.mrb[0].mxu0 %v1465
        %v2317 = vpop.f32.mrb[0].mxu0
        %v2318 = vadd.f32 %v1748, %v2317
        %v2319 = vpop.f32.mrb[0].mxu0
        %v2320 = vadd.f32 %v1752, %v2319
        %v2321 = vpop.f32.mrb[0].mxu0
        %v2322 = vadd.f32 %v1748, %v2321
        %v2323 = vpop.f32.mrb[0].mxu0
        %v2324 = vadd.f32 %v1752, %v2323
        %2325 = vmatprep.mubr.bf16.mxu0 %v1533
        %2326 = vmatmul.mubr.bf16.gmra.mrb[0].mxu0 %v1469
        %v2327 = vpop.f32.mrb[0].mxu0
        %v2328 = vadd.f32 %v1748, %v2327
        %v2329 = vpop.f32.mrb[0].mxu0
        %v2330 = vadd.f32 %v1752, %v2329
        %v2331 = vpop.f32.mrb[0].mxu0
        %v2332 = vadd.f32 %v1748, %v2331
        %v2333 = vpop.f32.mrb[0].mxu0
        %v2334 = vadd.f32 %v1752, %v2333
        %2335 = vmatprep.mubr.bf16.mxu0 %v1537
        %2336 = vmatmul.mubr.bf16.gmra.mrb[0].mxu0 %v1473
        %v2337 = vpop.f32.mrb[0].mxu0
        %v2338 = vadd.f32 %v1748, %v2337
        %v2339 = vpop.f32.mrb[0].mxu0
        %v2340 = vadd.f32 %v1752, %v2339
        %v2341 = vpop.f32.mrb[0].mxu0
        %v2342 = vadd.f32 %v1748, %v2341
        %v2343 = vpop.f32.mrb[0].mxu0
        %v2344 = vadd.f32 %v1752, %v2343
        %2345 = vmatprep.mubr.bf16.mxu0 %v1541
        %2346 = vmatmul.mubr.bf16.gmra.mrb[0].mxu0 %v1477
        %v2347 = vpop.f32.mrb[0].mxu0
        %v2348 = vadd.f32 %v1748, %v2347
        %v2349 = vpop.f32.mrb[0].mxu0
        %v2350 = vadd.f32 %v1752, %v2349
        %v2351 = vpop.f32.mrb[0].mxu0
        %v2352 = vadd.f32 %v1748, %v2351
        %v2353 = vpop.f32.mrb[0].mxu0
        %v2354 = vadd.f32 %v1752, %v2353
        %2355 = vdwg.mxu0
        %2356 = vmatprep.subr.bf16.mxu0 %v2004
        %2357 = vmatpush1.bf16.msra.mxu0 %v2003
        %2358 = vmatprep.subr.bf16.mxu0 %v2006
        %2359 = vmatpush1.bf16.msra.mxu0 %v2005
        %2360 = vmatprep.subr.bf16.mxu0 %v2008
        %2361 = vmatpush1.bf16.msra.mxu0 %v2007
        %2362 = vmatprep.subr.bf16.mxu0 %v2010
        %2363 = vmatpush1.bf16.msra.mxu0 %v2009
        %2364 = vmatprep.subr.bf16.mxu0 %v2012
        %2365 = vmatpush1.bf16.msra.mxu0 %v2011
        %2366 = vmatprep.subr.bf16.mxu0 %v2014
        %2367 = vmatpush1.bf16.msra.mxu0 %v2013
        %2368 = vmatprep.subr.bf16.mxu0 %v2016
        %2369 = vmatpush1.bf16.msra.mxu0 %v2015
        %2370 = vmatprep.subr.bf16.mxu0 %v2018
        %2371 = vmatpush1.bf16.msra.mxu0 %v2017
        %2372 = vmatprep.subr.bf16.mxu0 %v2020
        %2373 = vmatpush1.bf16.msra.mxu0 %v2019
        %2374 = vmatprep.subr.bf16.mxu0 %v2022
        %2375 = vmatpush1.bf16.msra.mxu0 %v2021
        %2376 = vmatprep.subr.bf16.mxu0 %v2024
        %2377 = vmatpush1.bf16.msra.mxu0 %v2023
        %2378 = vmatprep.subr.bf16.mxu0 %v2026
        %2379 = vmatpush1.bf16.msra.mxu0 %v2025
        %2380 = vmatprep.subr.bf16.mxu0 %v2028
        %2381 = vmatpush1.bf16.msra.mxu0 %v2027
        %2382 = vmatprep.subr.bf16.mxu0 %v2030
        %2383 = vmatpush1.bf16.msra.mxu0 %v2029
        %2384 = vmatprep.subr.bf16.mxu0 %v2032
        %2385 = vmatpush1.bf16.msra.mxu0 %v2031
        %2386 = vmatprep.subr.bf16.mxu0 %v2034
        %2387 = vmatpush1.bf16.msra.mxu0 %v2033
        %2388 = vmatprep.mubr.bf16.mxu0 %v1609
        %2389 = vmatmul.mubr.bf16.gmra.mrb[0].mxu0 %v1545
        %v2390 = vpop.f32.mrb[0].mxu0
        %v2391 = vadd.f32 %v2198, %v2390
        %v2392 = vpop.f32.mrb[0].mxu0
        %v2393 = vadd.f32 %v2200, %v2392
        %v2394 = vpop.f32.mrb[0].mxu0
        %v2395 = vadd.f32 %v2202, %v2394
        %v2396 = vpop.f32.mrb[0].mxu0
        %v2397 = vadd.f32 %v2204, %v2396
        %2398 = vmatprep.mubr.bf16.mxu0 %v1613
        %2399 = vmatmul.mubr.bf16.gmra.mrb[0].mxu0 %v1549
        %v2400 = vpop.f32.mrb[0].mxu0
        %v2401 = vadd.f32 %v2208, %v2400
        %v2402 = vpop.f32.mrb[0].mxu0
        %v2403 = vadd.f32 %v2210, %v2402
        %v2404 = vpop.f32.mrb[0].mxu0
        %v2405 = vadd.f32 %v2212, %v2404
        %v2406 = vpop.f32.mrb[0].mxu0
        %v2407 = vadd.f32 %v2214, %v2406
        %2408 = vmatprep.mubr.bf16.mxu0 %v1617
        %2409 = vmatmul.mubr.bf16.gmra.mrb[0].mxu0 %v1553
        %v2410 = vpop.f32.mrb[0].mxu0
        %v2411 = vadd.f32 %v2218, %v2410
        %v2412 = vpop.f32.mrb[0].mxu0
        %v2413 = vadd.f32 %v2220, %v2412
        %v2414 = vpop.f32.mrb[0].mxu0
        %v2415 = vadd.f32 %v2222, %v2414
        %v2416 = vpop.f32.mrb[0].mxu0
        %v2417 = vadd.f32 %v2224, %v2416
        %2418 = vmatprep.mubr.bf16.mxu0 %v1621
        %2419 = vmatmul.mubr.bf16.gmra.mrb[0].mxu0 %v1557
        %v2420 = vpop.f32.mrb[0].mxu0
        %v2421 = vadd.f32 %v2228, %v2420
        %v2422 = vpop.f32.mrb[0].mxu0
        %v2423 = vadd.f32 %v2230, %v2422
        %v2424 = vpop.f32.mrb[0].mxu0
        %v2425 = vadd.f32 %v2232, %v2424
        %v2426 = vpop.f32.mrb[0].mxu0
        %v2427 = vadd.f32 %v2234, %v2426
        %2428 = vmatprep.mubr.bf16.mxu0 %v1625
        %2429 = vmatmul.mubr.bf16.gmra.mrb[0].mxu0 %v1561
        %v2430 = vpop.f32.mrb[0].mxu0
        %v2431 = vadd.f32 %v2238, %v2430
        %v2432 = vpop.f32.mrb[0].mxu0
        %v2433 = vadd.f32 %v2240, %v2432
        %v2434 = vpop.f32.mrb[0].mxu0
        %v2435 = vadd.f32 %v2242, %v2434
        %v2436 = vpop.f32.mrb[0].mxu0
        %v2437 = vadd.f32 %v2244, %v2436
        %2438 = vmatprep.mubr.bf16.mxu0 %v1629
        %2439 = vmatmul.mubr.bf16.gmra.mrb[0].mxu0 %v1565
        %v2440 = vpop.f32.mrb[0].mxu0
        %v2441 = vadd.f32 %v2248, %v2440
        %v2442 = vpop.f32.mrb[0].mxu0
        %v2443 = vadd.f32 %v2250, %v2442
        %v2444 = vpop.f32.mrb[0].mxu0
        %v2445 = vadd.f32 %v2252, %v2444
        %v2446 = vpop.f32.mrb[0].mxu0
        %v2447 = vadd.f32 %v2254, %v2446
        %2448 = vmatprep.mubr.bf16.mxu0 %v1633
        %2449 = vmatmul.mubr.bf16.gmra.mrb[0].mxu0 %v1569
        %v2450 = vpop.f32.mrb[0].mxu0
        %v2451 = vadd.f32 %v2258, %v2450
        %v2452 = vpop.f32.mrb[0].mxu0
        %v2453 = vadd.f32 %v2260, %v2452
        %v2454 = vpop.f32.mrb[0].mxu0
        %v2455 = vadd.f32 %v2262, %v2454
        %v2456 = vpop.f32.mrb[0].mxu0
        %v2457 = vadd.f32 %v2264, %v2456
        %2458 = vmatprep.mubr.bf16.mxu0 %v1637
        %2459 = vmatmul.mubr.bf16.gmra.mrb[0].mxu0 %v1573
        %v2460 = vpop.f32.mrb[0].mxu0
        %v2461 = vadd.f32 %v2268, %v2460
        %v2462 = vpop.f32.mrb[0].mxu0
        %v2463 = vadd.f32 %v2270, %v2462
        %v2464 = vpop.f32.mrb[0].mxu0
        %v2465 = vadd.f32 %v2272, %v2464
        %v2466 = vpop.f32.mrb[0].mxu0
        %v2467 = vadd.f32 %v2274, %v2466
        %2468 = vmatprep.mubr.bf16.mxu0 %v1641
        %2469 = vmatmul.mubr.bf16.gmra.mrb[0].mxu0 %v1577
        %v2470 = vpop.f32.mrb[0].mxu0
        %v2471 = vadd.f32 %v2278, %v2470
        %v2472 = vpop.f32.mrb[0].mxu0
        %v2473 = vadd.f32 %v2280, %v2472
        %v2474 = vpop.f32.mrb[0].mxu0
        %v2475 = vadd.f32 %v2282, %v2474
        %v2476 = vpop.f32.mrb[0].mxu0
        %v2477 = vadd.f32 %v2284, %v2476
        %2478 = vmatprep.mubr.bf16.mxu0 %v1645
        %2479 = vmatmul.mubr.bf16.gmra.mrb[0].mxu0 %v1581
        %v2480 = vpop.f32.mrb[0].mxu0
        %v2481 = vadd.f32 %v2288, %v2480
        %v2482 = vpop.f32.mrb[0].mxu0
        %v2483 = vadd.f32 %v2290, %v2482
        %v2484 = vpop.f32.mrb[0].mxu0
        %v2485 = vadd.f32 %v2292, %v2484
        %v2486 = vpop.f32.mrb[0].mxu0
        %v2487 = vadd.f32 %v2294, %v2486
        %2488 = vmatprep.mubr.bf16.mxu0 %v1649
        %2489 = vmatmul.mubr.bf16.gmra.mrb[0].mxu0 %v1585
        %v2490 = vpop.f32.mrb[0].mxu0
        %v2491 = vadd.f32 %v2298, %v2490
        %v2492 = vpop.f32.mrb[0].mxu0
        %v2493 = vadd.f32 %v2300, %v2492
        %v2494 = vpop.f32.mrb[0].mxu0
        %v2495 = vadd.f32 %v2302, %v2494
        %v2496 = vpop.f32.mrb[0].mxu0
        %v2497 = vadd.f32 %v2304, %v2496
        %2498 = vmatprep.mubr.bf16.mxu0 %v1653
        %2499 = vmatmul.mubr.bf16.gmra.mrb[0].mxu0 %v1589
        %v2500 = vpop.f32.mrb[0].mxu0
        %v2501 = vadd.f32 %v2308, %v2500
        %v2502 = vpop.f32.mrb[0].mxu0
        %v2503 = vadd.f32 %v2310, %v2502
        %v2504 = vpop.f32.mrb[0].mxu0
        %v2505 = vadd.f32 %v2312, %v2504
        %v2506 = vpop.f32.mrb[0].mxu0
        %v2507 = vadd.f32 %v2314, %v2506
        %2508 = vmatprep.mubr.bf16.mxu0 %v1657
        %2509 = vmatmul.mubr.bf16.gmra.mrb[0].mxu0 %v1593
        %v2510 = vpop.f32.mrb[0].mxu0
        %v2511 = vadd.f32 %v2318, %v2510
        %v2512 = vpop.f32.mrb[0].mxu0
        %v2513 = vadd.f32 %v2320, %v2512
        %v2514 = vpop.f32.mrb[0].mxu0
        %v2515 = vadd.f32 %v2322, %v2514
        %v2516 = vpop.f32.mrb[0].mxu0
        %v2517 = vadd.f32 %v2324, %v2516
        %2518 = vmatprep.mubr.bf16.mxu0 %v1661
        %2519 = vmatmul.mubr.bf16.gmra.mrb[0].mxu0 %v1597
        %v2520 = vpop.f32.mrb[0].mxu0
        %v2521 = vadd.f32 %v2328, %v2520
        %v2522 = vpop.f32.mrb[0].mxu0
        %v2523 = vadd.f32 %v2330, %v2522
        %v2524 = vpop.f32.mrb[0].mxu0
        %v2525 = vadd.f32 %v2332, %v2524
        %v2526 = vpop.f32.mrb[0].mxu0
        %v2527 = vadd.f32 %v2334, %v2526
        %2528 = vmatprep.mubr.bf16.mxu0 %v1665
        %2529 = vmatmul.mubr.bf16.gmra.mrb[0].mxu0 %v1601
        %v2530 = vpop.f32.mrb[0].mxu0
        %v2531 = vadd.f32 %v2338, %v2530
        %v2532 = vpop.f32.mrb[0].mxu0
        %v2533 = vadd.f32 %v2340, %v2532
        %v2534 = vpop.f32.mrb[0].mxu0
        %v2535 = vadd.f32 %v2342, %v2534
        %v2536 = vpop.f32.mrb[0].mxu0
        %v2537 = vadd.f32 %v2344, %v2536
        %2538 = vmatprep.mubr.bf16.mxu0 %v1669
        %2539 = vmatmul.mubr.bf16.gmra.mrb[0].mxu0 %v1605
        %v2540 = vpop.f32.mrb[0].mxu0
        %v2541 = vadd.f32 %v2348, %v2540
        %v2542 = vpop.f32.mrb[0].mxu0
        %v2543 = vadd.f32 %v2350, %v2542
        %v2544 = vpop.f32.mrb[0].mxu0
        %v2545 = vadd.f32 %v2352, %v2544
        %v2546 = vpop.f32.mrb[0].mxu0
        %v2547 = vadd.f32 %v2354, %v2546
        %2548 = vdwg.mxu0
        %2549 = vmatprep.subr.bf16.mxu0 %v2036
        %2550 = vmatpush1.bf16.msra.mxu0 %v2035
        %2551 = vmatprep.subr.bf16.mxu0 %v2038
        %2552 = vmatpush1.bf16.msra.mxu0 %v2037
        %2553 = vmatprep.subr.bf16.mxu0 %v2040
        %2554 = vmatpush1.bf16.msra.mxu0 %v2039
        %2555 = vmatprep.subr.bf16.mxu0 %v2042
        %2556 = vmatpush1.bf16.msra.mxu0 %v2041
        %2557 = vmatprep.subr.bf16.mxu0 0
        %2558 = vmatpush1.bf16.msra.mxu0 0
        %2559 = vmatprep.subr.bf16.mxu0 0
        %2560 = vmatpush1.bf16.msra.mxu0 0
        %2561 = vmatprep.subr.bf16.mxu0 0
        %2562 = vmatpush1.bf16.msra.mxu0 0
        %2563 = vmatprep.subr.bf16.mxu0 0
        %2564 = vmatpush1.bf16.msra.mxu0 0
        %2565 = vmatprep.subr.bf16.mxu0 0
        %2566 = vmatpush1.bf16.msra.mxu0 0
        %2567 = vmatprep.subr.bf16.mxu0 0
        %2568 = vmatpush1.bf16.msra.mxu0 0
        %2569 = vmatprep.subr.bf16.mxu0 0
        %2570 = vmatpush1.bf16.msra.mxu0 0
        %2571 = vmatprep.subr.bf16.mxu0 0
        %2572 = vmatpush1.bf16.msra.mxu0 0
        %2573 = vmatprep.subr.bf16.mxu0 0
        %2574 = vmatpush1.bf16.msra.mxu0 0
        %2575 = vmatprep.subr.bf16.mxu0 0
        %2576 = vmatpush1.bf16.msra.mxu0 0
        %2577 = vmatprep.subr.bf16.mxu0 0
        %2578 = vmatpush1.bf16.msra.mxu0 0
        %2579 = vmatprep.subr.bf16.mxu0 0
        %2580 = vmatpush1.bf16.msra.mxu0 0
        %2581 = vmatprep.mubr.bf16.mxu0 0
        %2582 = vmatmul.mubr.bf16.gmra.mrb[0].mxu0 %v2116
        %v2583 = vpop.f32.mrb[0].mxu0
        %v2584 = vadd.f32 %v2391, %v2583
        %v2585 = vpop.f32.mrb[0].mxu0
        %v2586 = vadd.f32 %v2393, %v2585
        %v2587 = vpop.f32.mrb[0].mxu0
        %v2588 = vadd.f32 %v2395, %v2587
        %v2589 = vpop.f32.mrb[0].mxu0
        %v2590 = vadd.f32 %v2397, %v2589
        %2591 = vmatprep.mubr.bf16.mxu0 0
        %2592 = vmatmul.mubr.bf16.gmra.mrb[0].mxu0 %v2119
        %v2593 = vpop.f32.mrb[0].mxu0
        %v2594 = vadd.f32 %v2401, %v2593
        %v2595 = vpop.f32.mrb[0].mxu0
        %v2596 = vadd.f32 %v2403, %v2595
        %v2597 = vpop.f32.mrb[0].mxu0
        %v2598 = vadd.f32 %v2405, %v2597
        %v2599 = vpop.f32.mrb[0].mxu0
        %v2600 = vadd.f32 %v2407, %v2599
        %2601 = vmatprep.mubr.bf16.mxu0 0
        %2602 = vmatmul.mubr.bf16.gmra.mrb[0].mxu0 %v2122
        %v2603 = vpop.f32.mrb[0].mxu0
        %v2604 = vadd.f32 %v2411, %v2603
        %v2605 = vpop.f32.mrb[0].mxu0
        %v2606 = vadd.f32 %v2413, %v2605
        %v2607 = vpop.f32.mrb[0].mxu0
        %v2608 = vadd.f32 %v2415, %v2607
        %v2609 = vpop.f32.mrb[0].mxu0
        %v2610 = vadd.f32 %v2417, %v2609
        %2611 = vmatprep.mubr.bf16.mxu0 0
        %2612 = vmatmul.mubr.bf16.gmra.mrb[0].mxu0 %v2125
        %v2613 = vpop.f32.mrb[0].mxu0
        %v2614 = vadd.f32 %v2421, %v2613
        %v2615 = vpop.f32.mrb[0].mxu0
        %v2616 = vadd.f32 %v2423, %v2615
        %v2617 = vpop.f32.mrb[0].mxu0
        %v2618 = vadd.f32 %v2425, %v2617
        %v2619 = vpop.f32.mrb[0].mxu0
        %v2620 = vadd.f32 %v2427, %v2619
        %2621 = vmatprep.mubr.bf16.mxu0 0
        %2622 = vmatmul.mubr.bf16.gmra.mrb[0].mxu0 %v2128
        %v2623 = vpop.f32.mrb[0].mxu0
        %v2624 = vadd.f32 %v2431, %v2623
        %v2625 = vpop.f32.mrb[0].mxu0
        %v2626 = vadd.f32 %v2433, %v2625
        %v2627 = vpop.f32.mrb[0].mxu0
        %v2628 = vadd.f32 %v2435, %v2627
        %v2629 = vpop.f32.mrb[0].mxu0
        %v2630 = vadd.f32 %v2437, %v2629
        %2631 = vmatprep.mubr.bf16.mxu0 0
        %2632 = vmatmul.mubr.bf16.gmra.mrb[0].mxu0 %v2131
        %v2633 = vpop.f32.mrb[0].mxu0
        %v2634 = vadd.f32 %v2441, %v2633
        %v2635 = vpop.f32.mrb[0].mxu0
        %v2636 = vadd.f32 %v2443, %v2635
        %v2637 = vpop.f32.mrb[0].mxu0
        %v2638 = vadd.f32 %v2445, %v2637
        %v2639 = vpop.f32.mrb[0].mxu0
        %v2640 = vadd.f32 %v2447, %v2639
        %2641 = vmatprep.mubr.bf16.mxu0 0
        %2642 = vmatmul.mubr.bf16.gmra.mrb[0].mxu0 %v2134
        %v2643 = vpop.f32.mrb[0].mxu0
        %v2644 = vadd.f32 %v2451, %v2643
        %v2645 = vpop.f32.mrb[0].mxu0
        %v2646 = vadd.f32 %v2453, %v2645
        %v2647 = vpop.f32.mrb[0].mxu0
        %v2648 = vadd.f32 %v2455, %v2647
        %v2649 = vpop.f32.mrb[0].mxu0
        %v2650 = vadd.f32 %v2457, %v2649
        %2651 = vmatprep.mubr.bf16.mxu0 0
        %2652 = vmatmul.mubr.bf16.gmra.mrb[0].mxu0 %v2137
        %v2653 = vpop.f32.mrb[0].mxu0
        %v2654 = vadd.f32 %v2461, %v2653
        %v2655 = vpop.f32.mrb[0].mxu0
        %v2656 = vadd.f32 %v2463, %v2655
        %v2657 = vpop.f32.mrb[0].mxu0
        %v2658 = vadd.f32 %v2465, %v2657
        %v2659 = vpop.f32.mrb[0].mxu0
        %v2660 = vadd.f32 %v2467, %v2659
        %2661 = vmatprep.mubr.bf16.mxu0 0
        %2662 = vmatmul.mubr.bf16.gmra.mrb[0].mxu0 %v2140
        %v2663 = vpop.f32.mrb[0].mxu0
        %v2664 = vadd.f32 %v2471, %v2663
        %v2665 = vpop.f32.mrb[0].mxu0
        %v2666 = vadd.f32 %v2473, %v2665
        %v2667 = vpop.f32.mrb[0].mxu0
        %v2668 = vadd.f32 %v2475, %v2667
        %v2669 = vpop.f32.mrb[0].mxu0
        %v2670 = vadd.f32 %v2477, %v2669
        %2671 = vmatprep.mubr.bf16.mxu0 0
        %2672 = vmatmul.mubr.bf16.gmra.mrb[0].mxu0 %v2143
        %v2673 = vpop.f32.mrb[0].mxu0
        %v2674 = vadd.f32 %v2481, %v2673
        %v2675 = vpop.f32.mrb[0].mxu0
        %v2676 = vadd.f32 %v2483, %v2675
        %v2677 = vpop.f32.mrb[0].mxu0
        %v2678 = vadd.f32 %v2485, %v2677
        %v2679 = vpop.f32.mrb[0].mxu0
        %v2680 = vadd.f32 %v2487, %v2679
        %2681 = vmatprep.mubr.bf16.mxu0 0
        %2682 = vmatmul.mubr.bf16.gmra.mrb[0].mxu0 %v2146
        %v2683 = vpop.f32.mrb[0].mxu0
        %v2684 = vadd.f32 %v2491, %v2683
        %v2685 = vpop.f32.mrb[0].mxu0
        %v2686 = vadd.f32 %v2493, %v2685
        %v2687 = vpop.f32.mrb[0].mxu0
        %v2688 = vadd.f32 %v2495, %v2687
        %v2689 = vpop.f32.mrb[0].mxu0
        %v2690 = vadd.f32 %v2497, %v2689
        %2691 = vmatprep.mubr.bf16.mxu0 0
        %2692 = vmatmul.mubr.bf16.gmra.mrb[0].mxu0 %v2149
        %v2693 = vpop.f32.mrb[0].mxu0
        %v2694 = vadd.f32 %v2501, %v2693
        %v2695 = vpop.f32.mrb[0].mxu0
        %v2696 = vadd.f32 %v2503, %v2695
        %v2697 = vpop.f32.mrb[0].mxu0
        %v2698 = vadd.f32 %v2505, %v2697
        %v2699 = vpop.f32.mrb[0].mxu0
        %v2700 = vadd.f32 %v2507, %v2699
        %2701 = vmatprep.mubr.bf16.mxu0 0
        %2702 = vmatmul.mubr.bf16.gmra.mrb[0].mxu0 %v2152
        %v2703 = vpop.f32.mrb[0].mxu0
        %v2704 = vadd.f32 %v2511, %v2703
        %v2705 = vpop.f32.mrb[0].mxu0
        %v2706 = vadd.f32 %v2513, %v2705
        %v2707 = vpop.f32.mrb[0].mxu0
        %v2708 = vadd.f32 %v2515, %v2707
        %v2709 = vpop.f32.mrb[0].mxu0
        %v2710 = vadd.f32 %v2517, %v2709
        %2711 = vmatprep.mubr.bf16.mxu0 0
        %2712 = vmatmul.mubr.bf16.gmra.mrb[0].mxu0 %v2155
        %v2713 = vpop.f32.mrb[0].mxu0
        %v2714 = vadd.f32 %v2521, %v2713
        %v2715 = vpop.f32.mrb[0].mxu0
        %v2716 = vadd.f32 %v2523, %v2715
        %v2717 = vpop.f32.mrb[0].mxu0
        %v2718 = vadd.f32 %v2525, %v2717
        %v2719 = vpop.f32.mrb[0].mxu0
        %v2720 = vadd.f32 %v2527, %v2719
        %2721 = vmatprep.mubr.bf16.mxu0 0
        %2722 = vmatmul.mubr.bf16.gmra.mrb[0].mxu0 %v2158
        %v2723 = vpop.f32.mrb[0].mxu0
        %v2724 = vadd.f32 %v2531, %v2723
        %v2725 = vpop.f32.mrb[0].mxu0
        %v2726 = vadd.f32 %v2533, %v2725
        %v2727 = vpop.f32.mrb[0].mxu0
        %v2728 = vadd.f32 %v2535, %v2727
        %v2729 = vpop.f32.mrb[0].mxu0
        %v2730 = vadd.f32 %v2537, %v2729
        %2731 = vmatprep.mubr.bf16.mxu0 0
        %2732 = vmatmul.mubr.bf16.gmra.mrb[0].mxu0 %v2161
        %v2733 = vpop.f32.mrb[0].mxu0
        %v2734 = vadd.f32 %v2541, %v2733
        %v2735 = vpop.f32.mrb[0].mxu0
        %v2736 = vadd.f32 %v2543, %v2735
        %v2737 = vpop.f32.mrb[0].mxu0
        %v2738 = vadd.f32 %v2545, %v2737
        %v2739 = vpop.f32.mrb[0].mxu0
        %v2740 = vadd.f32 %v2547, %v2739
        %2741 = vdwg.mxu0
        %s2742 = sld [smem:[#allocation2]]
        %vm2743 = vcmp.gt.f32.partialorder %v2584, 0.0
        %vm2744 = vcmp.gt.f32.partialorder %v2586, 0.0
        %vm2745 = vcmp.gt.f32.partialorder %v2588, 0.0
        %vm2746 = vcmp.gt.f32.partialorder %v2590, 0.0
        %vm2747 = vcmp.gt.f32.partialorder %v2594, 0.0
        %vm2748 = vcmp.gt.f32.partialorder %v2596, 0.0
        %vm2749 = vcmp.gt.f32.partialorder %v2598, 0.0
        %vm2750 = vcmp.gt.f32.partialorder %v2600, 0.0
        %vm2751 = vcmp.gt.f32.partialorder %v2604, 0.0
        %vm2752 = vcmp.gt.f32.partialorder %v2606, 0.0
        %vm2753 = vcmp.gt.f32.partialorder %v2608, 0.0
        %vm2754 = vcmp.gt.f32.partialorder %v2610, 0.0
        %vm2755 = vcmp.gt.f32.partialorder %v2614, 0.0
        %vm2756 = vcmp.gt.f32.partialorder %v2616, 0.0
        %vm2757 = vcmp.gt.f32.partialorder %v2618, 0.0
        %vm2758 = vcmp.gt.f32.partialorder %v2620, 0.0
        %vm2759 = vcmp.gt.f32.partialorder %v2624, 0.0
        %vm2760 = vcmp.gt.f32.partialorder %v2626, 0.0
        %vm2761 = vcmp.gt.f32.partialorder %v2628, 0.0
        %vm2762 = vcmp.gt.f32.partialorder %v2630, 0.0
        %vm2763 = vcmp.gt.f32.partialorder %v2634, 0.0
        %vm2764 = vcmp.gt.f32.partialorder %v2636, 0.0
        %vm2765 = vcmp.gt.f32.partialorder %v2638, 0.0
        %vm2766 = vcmp.gt.f32.partialorder %v2640, 0.0
        %vm2767 = vcmp.gt.f32.partialorder %v2644, 0.0
        %vm2768 = vcmp.gt.f32.partialorder %v2646, 0.0
        %vm2769 = vcmp.gt.f32.partialorder %v2648, 0.0
        %vm2770 = vcmp.gt.f32.partialorder %v2650, 0.0
        %vm2771 = vcmp.gt.f32.partialorder %v2654, 0.0
        %vm2772 = vcmp.gt.f32.partialorder %v2656, 0.0
        %vm2773 = vcmp.gt.f32.partialorder %v2658, 0.0
        %vm2774 = vcmp.gt.f32.partialorder %v2660, 0.0
        %vm2775 = vcmp.gt.f32.partialorder %v2664, 0.0
        %vm2776 = vcmp.gt.f32.partialorder %v2666, 0.0
        %vm2777 = vcmp.gt.f32.partialorder %v2668, 0.0
        %vm2778 = vcmp.gt.f32.partialorder %v2670, 0.0
        %vm2779 = vcmp.gt.f32.partialorder %v2674, 0.0
        %vm2780 = vcmp.gt.f32.partialorder %v2676, 0.0
        %vm2781 = vcmp.gt.f32.partialorder %v2678, 0.0
        %vm2782 = vcmp.gt.f32.partialorder %v2680, 0.0
        %vm2783 = vcmp.gt.f32.partialorder %v2684, 0.0
        %vm2784 = vcmp.gt.f32.partialorder %v2686, 0.0
        %vm2785 = vcmp.gt.f32.partialorder %v2688, 0.0
        %vm2786 = vcmp.gt.f32.partialorder %v2690, 0.0
        %vm2787 = vcmp.gt.f32.partialorder %v2694, 0.0
        %vm2788 = vcmp.gt.f32.partialorder %v2696, 0.0
        %vm2789 = vcmp.gt.f32.partialorder %v2698, 0.0
        %vm2790 = vcmp.gt.f32.partialorder %v2700, 0.0
        %vm2791 = vcmp.gt.f32.partialorder %v2704, 0.0
        %vm2792 = vcmp.gt.f32.partialorder %v2706, 0.0
        %vm2793 = vcmp.gt.f32.partialorder %v2708, 0.0
        %vm2794 = vcmp.gt.f32.partialorder %v2710, 0.0
        %vm2795 = vcmp.gt.f32.partialorder %v2714, 0.0
        %vm2796 = vcmp.gt.f32.partialorder %v2716, 0.0
        %vm2797 = vcmp.gt.f32.partialorder %v2718, 0.0
        %vm2798 = vcmp.gt.f32.partialorder %v2720, 0.0
        %vm2799 = vcmp.gt.f32.partialorder %v2724, 0.0
        %vm2800 = vcmp.gt.f32.partialorder %v2726, 0.0
        %vm2801 = vcmp.gt.f32.partialorder %v2728, 0.0
        %vm2802 = vcmp.gt.f32.partialorder %v2730, 0.0
        %vm2803 = vcmp.gt.f32.partialorder %v2734, 0.0
        %vm2804 = vcmp.gt.f32.partialorder %v2736, 0.0
        %vm2805 = vcmp.gt.f32.partialorder %v2738, 0.0
        %vm2806 = vcmp.gt.f32.partialorder %v2740, 0.0
        %v2807 = vstv %s2742
        %v2808 = vmul.f32 %v2807, %v2584
        %v2809 = vmul.f32 %v2807, %v2586
        %v2810 = vmul.f32 %v2807, %v2588
        %v2811 = vmul.f32 %v2807, %v2590
        %v2812 = vmul.f32 %v2807, %v2594
        %v2813 = vmul.f32 %v2807, %v2596
        %v2814 = vmul.f32 %v2807, %v2598
        %v2815 = vmul.f32 %v2807, %v2600
        %v2816 = vmul.f32 %v2807, %v2604
        %v2817 = vmul.f32 %v2807, %v2606
        %v2818 = vmul.f32 %v2807, %v2608
        %v2819 = vmul.f32 %v2807, %v2610
        %v2820 = vmul.f32 %v2807, %v2614
        %v2821 = vmul.f32 %v2807, %v2616
        %v2822 = vmul.f32 %v2807, %v2618
        %v2823 = vmul.f32 %v2807, %v2620
        %v2824 = vmul.f32 %v2807, %v2624
        %v2825 = vmul.f32 %v2807, %v2626
        %v2826 = vmul.f32 %v2807, %v2628
        %v2827 = vmul.f32 %v2807, %v2630
        %v2828 = vmul.f32 %v2807, %v2634
        %v2829 = vmul.f32 %v2807, %v2636
        %v2830 = vmul.f32 %v2807, %v2638
        %v2831 = vmul.f32 %v2807, %v2640
        %v2832 = vmul.f32 %v2807, %v2644
        %v2833 = vmul.f32 %v2807, %v2646
        %v2834 = vmul.f32 %v2807, %v2648
        %v2835 = vmul.f32 %v2807, %v2650
        %v2836 = vmul.f32 %v2807, %v2654
        %v2837 = vmul.f32 %v2807, %v2656
        %v2838 = vmul.f32 %v2807, %v2658
        %v2839 = vmul.f32 %v2807, %v2660
        %v2840 = vmul.f32 %v2807, %v2664
        %v2841 = vmul.f32 %v2807, %v2666
        %v2842 = vmul.f32 %v2807, %v2668
        %v2843 = vmul.f32 %v2807, %v2670
        %v2844 = vmul.f32 %v2807, %v2674
        %v2845 = vmul.f32 %v2807, %v2676
        %v2846 = vmul.f32 %v2807, %v2678
        %v2847 = vmul.f32 %v2807, %v2680
        %v2848 = vmul.f32 %v2807, %v2684
        %v2849 = vmul.f32 %v2807, %v2686
        %v2850 = vmul.f32 %v2807, %v2688
        %v2851 = vmul.f32 %v2807, %v2690
        %v2852 = vmul.f32 %v2807, %v2694
        %v2853 = vmul.f32 %v2807, %v2696
        %v2854 = vmul.f32 %v2807, %v2698
        %v2855 = vmul.f32 %v2807, %v2700
        %v2856 = vmul.f32 %v2807, %v2704
        %v2857 = vmul.f32 %v2807, %v2706
        %v2858 = vmul.f32 %v2807, %v2708
        %v2859 = vmul.f32 %v2807, %v2710
        %v2860 = vmul.f32 %v2807, %v2714
        %v2861 = vmul.f32 %v2807, %v2716
        %v2862 = vmul.f32 %v2807, %v2718
        %v2863 = vmul.f32 %v2807, %v2720
        %v2864 = vmul.f32 %v2807, %v2724
        %v2865 = vmul.f32 %v2807, %v2726
        %v2866 = vmul.f32 %v2807, %v2728
        %v2867 = vmul.f32 %v2807, %v2730
        %v2868 = vmul.f32 %v2807, %v2734
        %v2869 = vmul.f32 %v2807, %v2736
        %v2870 = vmul.f32 %v2807, %v2738
        %v2871 = vmul.f32 %v2807, %v2740
        %v2872 = vsel %vm2743, %v2584, %v2808
        %v2873 = vsel %vm2744, %v2586, %v2809
        %v2874 = vsel %vm2745, %v2588, %v2810
        %v2875 = vsel %vm2746, %v2590, %v2811
        %v2876 = vsel %vm2747, %v2594, %v2812
        %v2877 = vsel %vm2748, %v2596, %v2813
        %v2878 = vsel %vm2749, %v2598, %v2814
        %v2879 = vsel %vm2750, %v2600, %v2815
        %v2880 = vsel %vm2751, %v2604, %v2816
        %v2881 = vsel %vm2752, %v2606, %v2817
        %v2882 = vsel %vm2753, %v2608, %v2818
        %v2883 = vsel %vm2754, %v2610, %v2819
        %v2884 = vsel %vm2755, %v2614, %v2820
        %v2885 = vsel %vm2756, %v2616, %v2821
        %v2886 = vsel %vm2757, %v2618, %v2822
        %v2887 = vsel %vm2758, %v2620, %v2823
        %v2888 = vsel %vm2759, %v2624, %v2824
        %v2889 = vsel %vm2760, %v2626, %v2825
        %v2890 = vsel %vm2761, %v2628, %v2826
        %v2891 = vsel %vm2762, %v2630, %v2827
        %v2892 = vsel %vm2763, %v2634, %v2828
        %v2893 = vsel %vm2764, %v2636, %v2829
        %v2894 = vsel %vm2765, %v2638, %v2830
        %v2895 = vsel %vm2766, %v2640, %v2831
        %v2896 = vsel %vm2767, %v2644, %v2832
        %v2897 = vsel %vm2768, %v2646, %v2833
        %v2898 = vsel %vm2769, %v2648, %v2834
        %v2899 = vsel %vm2770, %v2650, %v2835
        %v2900 = vsel %vm2771, %v2654, %v2836
        %v2901 = vsel %vm2772, %v2656, %v2837
        %v2902 = vsel %vm2773, %v2658, %v2838
        %v2903 = vsel %vm2774, %v2660, %v2839
        %v2904 = vsel %vm2775, %v2664, %v2840
        %v2905 = vsel %vm2776, %v2666, %v2841
        %v2906 = vsel %vm2777, %v2668, %v2842
        %v2907 = vsel %vm2778, %v2670, %v2843
        %v2908 = vsel %vm2779, %v2674, %v2844
        %v2909 = vsel %vm2780, %v2676, %v2845
        %v2910 = vsel %vm2781, %v2678, %v2846
        %v2911 = vsel %vm2782, %v2680, %v2847
        %v2912 = vsel %vm2783, %v2684, %v2848
        %v2913 = vsel %vm2784, %v2686, %v2849
        %v2914 = vsel %vm2785, %v2688, %v2850
        %v2915 = vsel %vm2786, %v2690, %v2851
        %v2916 = vsel %vm2787, %v2694, %v2852
        %v2917 = vsel %vm2788, %v2696, %v2853
        %v2918 = vsel %vm2789, %v2698, %v2854
        %v2919 = vsel %vm2790, %v2700, %v2855
        %v2920 = vsel %vm2791, %v2704, %v2856
        %v2921 = vsel %vm2792, %v2706, %v2857
        %v2922 = vsel %vm2793, %v2708, %v2858
        %v2923 = vsel %vm2794, %v2710, %v2859
        %v2924 = vsel %vm2795, %v2714, %v2860
        %v2925 = vsel %vm2796, %v2716, %v2861
        %v2926 = vsel %vm2797, %v2718, %v2862
        %v2927 = vsel %vm2798, %v2720, %v2863
        %v2928 = vsel %vm2799, %v2724, %v2864
        %v2929 = vsel %vm2800, %v2726, %v2865
        %v2930 = vsel %vm2801, %v2728, %v2866
        %v2931 = vsel %vm2802, %v2730, %v2867
        %v2932 = vsel %vm2803, %v2734, %v2868
        %v2933 = vsel %vm2804, %v2736, %v2869
        %v2934 = vsel %vm2805, %v2738, %v2870
        %v2935 = vsel %vm2806, %v2740, %v2871
        %2936 = vst [vmem:[%s245] sm:$0xff] %v2872
        %2937 = vst [vmem:[%s245 + $0x8] sm:$0xff] %v2874
        %2938 = vst [vmem:[%s245 + $0x20] sm:$0xff] %v2876
        %2939 = vst [vmem:[%s245 + $0x28] sm:$0xff] %v2878
        %2940 = vst [vmem:[%s245 + $0x40] sm:$0xff] %v2880
        %2941 = vst [vmem:[%s245 + $0x48] sm:$0xff] %v2882
        %2942 = vst [vmem:[%s245 + $0x60] sm:$0xff] %v2884
        %2943 = vst [vmem:[%s245 + $0x68] sm:$0xff] %v2886
        %2944 = vst [vmem:[%s245 + $0x80] sm:$0xff] %v2888
        %2945 = vst [vmem:[%s245 + $0x88] sm:$0xff] %v2890
        %2946 = vst [vmem:[%s245 + $0xa0] sm:$0xff] %v2892
        %2947 = vst [vmem:[%s245 + $0xa8] sm:$0xff] %v2894
        %2948 = vst [vmem:[%s245 + $0xc0] sm:$0xff] %v2896
        %2949 = vst [vmem:[%s245 + $0xc8] sm:$0xff] %v2898
        %2950 = vst [vmem:[%s245 + $0xe0] sm:$0xff] %v2900
        %2951 = vst [vmem:[%s245 + $0xe8] sm:$0xff] %v2902
        %2952 = vst [vmem:[%s245 + $0x100] sm:$0xff] %v2904
        %2953 = vst [vmem:[%s245 + $0x108] sm:$0xff] %v2906
        %2954 = vst [vmem:[%s245 + $0x120] sm:$0xff] %v2908
        %2955 = vst [vmem:[%s245 + $0x128] sm:$0xff] %v2910
        %2956 = vst [vmem:[%s245 + $0x140] sm:$0xff] %v2912
        %2957 = vst [vmem:[%s245 + $0x148] sm:$0xff] %v2914
        %2958 = vst [vmem:[%s245 + $0x160] sm:$0xff] %v2916
        %2959 = vst [vmem:[%s245 + $0x168] sm:$0xff] %v2918
        %2960 = vst [vmem:[%s245 + $0x180] sm:$0xff] %v2920
        %2961 = vst [vmem:[%s245 + $0x188] sm:$0xff] %v2922
        %2962 = vst [vmem:[%s245 + $0x1a0] sm:$0xff] %v2924
        %2963 = vst [vmem:[%s245 + $0x1a8] sm:$0xff] %v2926
        %2964 = vst [vmem:[%s245 + $0x1c0] sm:$0xff] %v2928
        %2965 = vst [vmem:[%s245 + $0x1c8] sm:$0xff] %v2930
        %2966 = vst [vmem:[%s245 + $0x1e0] sm:$0xff] %v2932
        %2967 = vst [vmem:[%s245 + $0x1e8] sm:$0xff] %v2934
        %s2968 = scalar_lea.vmem %s245, 16 [#allocation8]
        %2969 = vst [vmem:[%s2968] sm:$0xff] %v2873
        %2970 = vst [vmem:[%s2968 + $0x8] sm:$0xff] %v2875
        %2971 = vst [vmem:[%s2968 + $0x20] sm:$0xff] %v2877
        %2972 = vst [vmem:[%s2968 + $0x28] sm:$0xff] %v2879
        %2973 = vst [vmem:[%s2968 + $0x40] sm:$0xff] %v2881
        %2974 = vst [vmem:[%s2968 + $0x48] sm:$0xff] %v2883
        %2975 = vst [vmem:[%s2968 + $0x60] sm:$0xff] %v2885
        %2976 = vst [vmem:[%s2968 + $0x68] sm:$0xff] %v2887
        %2977 = vst [vmem:[%s2968 + $0x80] sm:$0xff] %v2889
        %2978 = vst [vmem:[%s2968 + $0x88] sm:$0xff] %v2891
        %2979 = vst [vmem:[%s2968 + $0xa0] sm:$0xff] %v2893
        %2980 = vst [vmem:[%s2968 + $0xa8] sm:$0xff] %v2895
        %2981 = vst [vmem:[%s2968 + $0xc0] sm:$0xff] %v2897
        %2982 = vst [vmem:[%s2968 + $0xc8] sm:$0xff] %v2899
        %2983 = vst [vmem:[%s2968 + $0xe0] sm:$0xff] %v2901
        %2984 = vst [vmem:[%s2968 + $0xe8] sm:$0xff] %v2903
        %2985 = vst [vmem:[%s2968 + $0x100] sm:$0xff] %v2905
        %2986 = vst [vmem:[%s2968 + $0x108] sm:$0xff] %v2907
        %2987 = vst [vmem:[%s2968 + $0x120] sm:$0xff] %v2909
        %2988 = vst [vmem:[%s2968 + $0x128] sm:$0xff] %v2911
        %2989 = vst [vmem:[%s2968 + $0x140] sm:$0xff] %v2913
        %2990 = vst [vmem:[%s2968 + $0x148] sm:$0xff] %v2915
        %2991 = vst [vmem:[%s2968 + $0x160] sm:$0xff] %v2917
        %2992 = vst [vmem:[%s2968 + $0x168] sm:$0xff] %v2919
        %2993 = vst [vmem:[%s2968 + $0x180] sm:$0xff] %v2921
        %2994 = vst [vmem:[%s2968 + $0x188] sm:$0xff] %v2923
        %2995 = vst [vmem:[%s2968 + $0x1a0] sm:$0xff] %v2925
        %2996 = vst [vmem:[%s2968 + $0x1a8] sm:$0xff] %v2927
        %2997 = vst [vmem:[%s2968 + $0x1c0] sm:$0xff] %v2929
        %2998 = vst [vmem:[%s2968 + $0x1c8] sm:$0xff] %v2931
        %2999 = vst [vmem:[%s2968 + $0x1e0] sm:$0xff] %v2933
        %3000 = vst [vmem:[%s2968 + $0x1e8] sm:$0xff] %v2935
        %s3001 = sand.u32 %s134, 1
        %s3002 = scalar_lea.sflag [#allocation5], %s3001
        %s3003 = sand.u32 %s134, 1
        %s3004 = smul.addr %s3003, 512
        %s3005 = scalar_lea.vmem [#allocation8], %s3004
        // Predicated region
        $region45: #{tpu_custom_call.1} parent=35 // pred_check
          %p3006 = pneg %p144
        $region46: #{tpu_custom_call.1} parent=35 // pred_check_branch
          %3008 = sbr.rel (%p3006) target = $region48
        $region47: #{tpu_custom_call.1} parent=35 // pred_region
          %s3009 = smul.u32 16, %s28
          %s3011 = ssub.s32 8192, 8192
          %3012 = vsyncadd %s3002, %s3011
          %s3013 = smul.addr %s3009, 4
          %s3014 = smul.addr %s27, 64
          %s3015 = sadd.s32 %s3013, %s3014
          %s3016 = smul.addr %s3015, 128
          %s3017 = scalar_lea.hbm %s4, %s3016
          %s3018 = sshll.u32 %s3005, 4
          %s3019 = int_to_ptr.vmem [resolvable:$true] %s3018
          %3024 = dma.vmem_to_hbm [thread:$0]  %s3019, 8192, %s3017, %s3002, 128, 128, 8
        $region48: #{tpu_custom_call.1} parent=35 // pred_fallthru
          _
      $region36: #{tpu_custom_call.1} parent=5 // pred_fallthru
        _
      %p3025 = scmp.le.s32.totalorder 2, %s18
      // Predicated region
      $region49: #{tpu_custom_call.1} parent=5 // pred_check
        %p3026 = pneg %p3025
      $region50: #{tpu_custom_call.1} parent=5 // pred_check_branch
        %3028 = sbr.rel (%p3026) target = $region52
      $region51: #{tpu_custom_call.1} parent=5 // pred_region
        %s3029 = ssub.s32 %s18, 2
        // Predicated region
        $region53: #{tpu_custom_call.1} parent=51 // pred_check
          %p3030 = pneg %p150
        $region54: #{tpu_custom_call.1} parent=51 // pred_check_branch
          %3032 = sbr.rel (%p3030) target = $region56
        $region55: #{tpu_custom_call.1} parent=51 // pred_region
          %s3033 = sand.u32 %s135, 1
          %s3034 = scalar_lea.sflag [#allocation5], %s3033
          %s3035 = sand.u32 %s135, 1
          %s3036 = smul.addr %s3035, 512
          %s3037 = scalar_lea.vmem [#allocation8], %s3036
          %3038 = dma.done %s3034, 8192
        $region56: #{tpu_custom_call.1} parent=51 // pred_fallthru
          _
      $region52: #{tpu_custom_call.1} parent=5 // pred_fallthru
        _
    $region6: #{tpu_custom_call.1} parent=1 // loop_footer
      %s22 = sadd.s32 1, %s18
    $region7: #{tpu_custom_call.1} parent=1 // loop_footer_branch
      %17 = sbr.rel target = $region3
    $region8: #{tpu_custom_call.1} parent=1 // loop_exit
      _
    %3039 = vsyncpa [#allocation4], 1
    %s3040 = scalar_lea.sflag [#allocation4], 1
    %3041 = vsyncpa %s3040, 1
    %3042 = vsyncpa [#allocation7], 1
    %3043 = vsyncpa [#allocation5], 1
    %s3044 = scalar_lea.sflag [#allocation5], 1
    %3045 = vsyncpa %s3044, 1

</llo_original>
